<compile_context>
chip_gen: v6e
topology: v6e:2x2x1
jax: 0.10.0
libtpu: 0.0.40
codegen_flags: <defaults>
</compile_context>

<pallas_src>
import functools

import jax
import jax.numpy as jnp
from jax.experimental import pallas as pl
from jax.experimental.pallas import tpu as pltpu

MXU_DTYPE = jnp.bfloat16   # MXU input dtype; accumulation is always f32


# -----------------------------------------------------------------------------
# In-kernel helpers (f32 VPU/EUP math)
# -----------------------------------------------------------------------------
def _layernorm(x, gamma, beta, eps):
    mu = jnp.mean(x, axis=-1, keepdims=True)
    var = jnp.mean(jnp.square(x - mu), axis=-1, keepdims=True)
    return (x - mu) * jax.lax.rsqrt(var + eps) * gamma + beta


def _gelu(x):
    # tanh-approx GELU (EUP tanh slot; erf lowering on Mosaic is not guaranteed).
    c = jnp.float32(0.7978845608028654)      # sqrt(2/pi)
    return 0.5 * x * (1.0 + jnp.tanh(c * (x + jnp.float32(0.044715) * x * x * x)))


def _rep_spec(shape):
    """BlockSpec for a weight replicated across the (single) batch grid axis."""
    return pl.BlockSpec(shape, lambda b: (0,) * len(shape))


# -----------------------------------------------------------------------------
# Kernel 1: embedding LayerNorm  (grid over batch)
# -----------------------------------------------------------------------------
def _emb_ln_kernel(x_ref, g_ref, b_ref, o_ref, *, eps):
    x = x_ref[0].astype(jnp.float32)                              # (S, H)
    o_ref[0] = _layernorm(x, g_ref[...].astype(jnp.float32),
                          b_ref[...].astype(jnp.float32), eps).astype(o_ref.dtype)


def embedding_layernorm_pallas(emb, gamma, beta, eps=1e-12):
    B, S, H = emb.shape
    return pl.pallas_call(
        functools.partial(_emb_ln_kernel, eps=eps),
        out_shape=jax.ShapeDtypeStruct((B, S, H), jnp.float32),
        grid=(B,),
        in_specs=[
            pl.BlockSpec((1, S, H), lambda b: (b, 0, 0)),
            _rep_spec((1, H)),
            _rep_spec((1, H)),
        ],
        out_specs=pl.BlockSpec((1, S, H), lambda b: (b, 0, 0)),
        compiler_params=pltpu.CompilerParams(dimension_semantics=("parallel",)),
    )(emb, gamma.reshape(1, H), beta.reshape(1, H))


# -----------------------------------------------------------------------------
# Kernel 2: one fully fused transformer encoder layer  (grid over batch)
#   fused QKV -> per-head attention (mask bias built in-kernel) -> out-proj folded
#   per head -> +residual -> LN1 -> FFN(GELU) -> +residual -> LN2
# -----------------------------------------------------------------------------
def _encoder_layer_kernel(x_ref, mask_ref,
                          wqkv_ref, bqkv_ref, wo_ref, bo_ref,
                          ln1g_ref, ln1b_ref,
                          w1_ref, b1_ref, w2_ref, b2_ref,
                          ln2g_ref, ln2b_ref,
                          o_ref, *, num_heads, head_dim, scale, eps):
    f32 = jnp.float32
    H = num_heads * head_dim

    x = x_ref[0].astype(f32)                                      # (S, H)
    mask = mask_ref[0].astype(f32)                                # (1, S)
    bias = (1.0 - mask) * jnp.float32(-1e9)                       # broadcast over query rows

    # ---- fused QKV projection: one (S,H)@(H,3H) MXU pass, bf16 in / f32 accumulate ----
    qkv = jnp.dot(x.astype(MXU_DTYPE), wqkv_ref[...],
                  preferred_element_type=f32) + bqkv_ref[...].astype(f32)   # (S, 3H)
    q = qkv[:, 0 * H:1 * H]
    k = qkv[:, 1 * H:2 * H]
    v = qkv[:, 2 * H:3 * H]

    # ---- multi-head attention; fold each head's slice of the output projection in ----
    attn = jnp.zeros((q.shape[0], H), f32)
    for h in range(num_heads):                                    # static, tiny loop
        lo = h * head_dim
        qh = q[:, lo:lo + head_dim]
        kh = k[:, lo:lo + head_dim]
        vh = v[:, lo:lo + head_dim]
        s = jnp.dot(qh, kh.T, preferred_element_type=f32) * scale + bias    # (S, S)
        m = jnp.max(s, axis=-1, keepdims=True)
        p = jnp.exp(s - m)
        p = p / jnp.sum(p, axis=-1, keepdims=True)
        ctx_h = jnp.dot(p, vh, preferred_element_type=f32)                  # (S, dh)
        attn = attn + jnp.dot(ctx_h.astype(MXU_DTYPE),
                              wo_ref[lo:lo + head_dim, :],
                              preferred_element_type=f32)
    attn = attn + bo_ref[...].astype(f32)

    # ---- residual + LayerNorm 1 (fused, hides under MXU work) ----
    h1 = _layernorm(attn + x, ln1g_ref[...].astype(f32), ln1b_ref[...].astype(f32), eps)

    # ---- FFN (GELU) + residual + LayerNorm 2 ----
    ff = jnp.dot(h1.astype(MXU_DTYPE), w1_ref[...],
                 preferred_element_type=f32) + b1_ref[...].astype(f32)
    ff = _gelu(ff)
    ff = jnp.dot(ff.astype(MXU_DTYPE), w2_ref[...],
                 preferred_element_type=f32) + b2_ref[...].astype(f32)
    h2 = _layernorm(ff + h1, ln2g_ref[...].astype(f32), ln2b_ref[...].astype(f32), eps)

    o_ref[0] = h2.astype(o_ref.dtype)


def encoder_layer_pallas(x, mask, lp, *, num_heads, head_dim, eps=1e-12):
    """x: (B,S,H) f32; mask: (B,1,S) f32 (1=keep, 0=pad); lp: layer params."""
    B, S, H = x.shape
    I = lp["w1"].shape[1]
    scale = 1.0 / float(head_dim) ** 0.5
    return pl.pallas_call(
        functools.partial(_encoder_layer_kernel, num_heads=num_heads,
                          head_dim=head_dim, scale=scale, eps=eps),
        out_shape=jax.ShapeDtypeStruct((B, S, H), jnp.float32),
        grid=(B,),
        in_specs=[
            pl.BlockSpec((1, S, H), lambda b: (b, 0, 0)),      # x
            pl.BlockSpec((1, 1, S), lambda b: (b, 0, 0)),      # mask
            _rep_spec((H, 3 * H)), _rep_spec((1, 3 * H)),      # wqkv, bqkv
            _rep_spec((H, H)), _rep_spec((1, H)),              # wo, bo
            _rep_spec((1, H)), _rep_spec((1, H)),              # ln1 g,b
            _rep_spec((H, I)), _rep_spec((1, I)),              # w1, b1
            _rep_spec((I, H)), _rep_spec((1, H)),              # w2, b2
            _rep_spec((1, H)), _rep_spec((1, H)),              # ln2 g,b
        ],
        out_specs=pl.BlockSpec((1, S, H), lambda b: (b, 0, 0)),
        compiler_params=pltpu.CompilerParams(dimension_semantics=("parallel",)),
    )(x, mask,
      lp["wqkv"].astype(MXU_DTYPE), lp["bqkv"].reshape(1, 3 * H),
      lp["wo"].astype(MXU_DTYPE), lp["bo"].reshape(1, H),
      lp["ln1_g"].reshape(1, H), lp["ln1_b"].reshape(1, H),
      lp["w1"].astype(MXU_DTYPE), lp["b1"].reshape(1, I),
      lp["w2"].astype(MXU_DTYPE), lp["b2"].reshape(1, H),
      lp["ln2_g"].reshape(1, H), lp["ln2_b"].reshape(1, H))


# -----------------------------------------------------------------------------
# Kernel 3: generation head (vocab projection) fused with its cross-entropy.
#   Writes lane-dense (S,V) logits once; reduces loss / valid to per-batch scalars
#   in-kernel (no per-row (N,1) writeback).
# -----------------------------------------------------------------------------
def _gen_head_ce_kernel(x_ref, w_ref, b_ref, labels_ref,
                        logits_ref, loss_ref, valid_ref, *, ignore_index):
    f32 = jnp.float32
    x = x_ref[0].astype(f32)                                      # (S, H)
    logits = jnp.dot(x.astype(MXU_DTYPE), w_ref[...],
                     preferred_element_type=f32) + b_ref[...].astype(f32)   # (S, V)
    logits_ref[0] = logits.astype(logits_ref.dtype)

    labels = labels_ref[0]                                        # (S, 1) int32
    m = jnp.max(logits, axis=-1, keepdims=True)
    lse = jnp.log(jnp.sum(jnp.exp(logits - m), axis=-1, keepdims=True)) + m  # (S, 1)
    col = jax.lax.broadcasted_iota(jnp.int32, logits.shape, 1)
    picked = jnp.sum(jnp.where(col == labels, logits, 0.0), axis=-1, keepdims=True)
    valid = (labels != ignore_index).astype(f32)                  # (S, 1)
    loss_ref[0] = jnp.sum((lse - picked) * valid, axis=0, keepdims=True)     # (1, 1)
    valid_ref[0] = jnp.sum(valid, axis=0, keepdims=True)


def gen_head_ce_pallas(x, w, b, labels3d, ignore_index=-100):
    """x: (B,S,H); w: (H,V); b: (V,); labels3d: (B,S,1) int32.
    Returns (logits (B,S,V), sum_loss scalar, sum_valid scalar)."""
    B, S, H = x.shape
    V = w.shape[1]
    logits, loss_p, valid_p = pl.pallas_call(
        functools.partial(_gen_head_ce_kernel, ignore_index=ignore_index),
        out_shape=(
            jax.ShapeDtypeStruct((B, S, V), jnp.float32),
            jax.ShapeDtypeStruct((B, 1, 1), jnp.float32),
            jax.ShapeDtypeStruct((B, 1, 1), jnp.float32),
        ),
        grid=(B,),
        in_specs=[
            pl.BlockSpec((1, S, H), lambda b_: (b_, 0, 0)),
            _rep_spec((H, V)),
            _rep_spec((1, V)),
            pl.BlockSpec((1, S, 1), lambda b_: (b_, 0, 0)),
        ],
        out_specs=(
            pl.BlockSpec((1, S, V), lambda b_: (b_, 0, 0)),
            pl.BlockSpec((1, 1, 1), lambda b_: (b_, 0, 0)),
            pl.BlockSpec((1, 1, 1), lambda b_: (b_, 0, 0)),
        ),
        compiler_params=pltpu.CompilerParams(dimension_semantics=("parallel",)),
    )(x, w.astype(MXU_DTYPE), b.reshape(1, V), labels3d)
    return logits, jnp.sum(loss_p), jnp.sum(valid_p)


# -----------------------------------------------------------------------------
# Mini-BERT + CounselingAI forward (parameters are synthetic / deterministic)
# -----------------------------------------------------------------------------
class MiniConfig:
    vocab_size = 64
    hidden = 32
    num_layers = 2
    num_heads = 2
    head_dim = 16            # hidden // num_heads
    intermediate = 64
    max_pos = 16
    type_vocab = 2
    num_topics = 10          # len(Config.topics)


def init_params(key, cfg):
    def nrm(k, shape, scale=0.02):
        return scale * jax.random.normal(k, shape, dtype=jnp.float32)

    keys = iter(jax.random.split(key, 64))
    p = {
        "word_emb": nrm(next(keys), (cfg.vocab_size, cfg.hidden)),
        "pos_emb": nrm(next(keys), (cfg.max_pos, cfg.hidden)),
        "type_emb": nrm(next(keys), (cfg.type_vocab, cfg.hidden)),
        "emb_ln_g": jnp.ones((cfg.hidden,), jnp.float32),
        "emb_ln_b": jnp.zeros((cfg.hidden,), jnp.float32),
        "layers": [],
        "pooler_w": nrm(next(keys), (cfg.hidden, cfg.hidden)),
        "pooler_b": jnp.zeros((cfg.hidden,), jnp.float32),
        "topic_w": nrm(next(keys), (cfg.hidden, cfg.num_topics)),
        "topic_b": jnp.zeros((cfg.num_topics,), jnp.float32),
        "gen_w": nrm(next(keys), (cfg.hidden, cfg.vocab_size)),
        "gen_b": jnp.zeros((cfg.vocab_size,), jnp.float32),
    }
    for _ in range(cfg.num_layers):
        lp = {
            # fused QKV weight (wq|wk|wv) -> single MXU pass per layer
            "wqkv": nrm(next(keys), (cfg.hidden, 3 * cfg.hidden)),
            "bqkv": jnp.zeros((3 * cfg.hidden,), jnp.float32),
            "wo": nrm(next(keys), (cfg.hidden, cfg.hidden)),
            "bo": jnp.zeros((cfg.hidden,), jnp.float32),
            "ln1_g": jnp.ones((cfg.hidden,), jnp.float32),
            "ln1_b": jnp.zeros((cfg.hidden,), jnp.float32),
            "w1": nrm(next(keys), (cfg.hidden, cfg.intermediate)),
            "b1": jnp.zeros((cfg.intermediate,), jnp.float32),
            "w2": nrm(next(keys), (cfg.intermediate, cfg.hidden)),
            "b2": jnp.zeros((cfg.hidden,), jnp.float32),
            "ln2_g": jnp.ones((cfg.hidden,), jnp.float32),
            "ln2_b": jnp.zeros((cfg.hidden,), jnp.float32),
        }
        p["layers"].append(lp)
    return p


def counseling_ai_forward(params, cfg, input_ids, attention_mask, token_type_ids,
                          topic_label=None, labels=None):
    B, S = input_ids.shape

    # ---- embeddings (gather = glue in JAX) -------------------------------------------------
    positions = jnp.arange(S, dtype=jnp.int32)
    emb = (jnp.take(params["word_emb"], input_ids, axis=0)
           + jnp.take(params["pos_emb"], positions, axis=0)[None, :, :]
           + jnp.take(params["type_emb"], token_type_ids, axis=0))            # (B,S,H)
    x = embedding_layernorm_pallas(emb, params["emb_ln_g"], params["emb_ln_b"])

    # (B,1,S) keep-mask; additive bias is built inside the attention kernel.
    mask = attention_mask.astype(jnp.float32).reshape(B, 1, S)

    # ---- encoder: ONE fused pallas_call per layer ------------------------------------------
    for lp in params["layers"]:
        x = encoder_layer_pallas(x, mask, lp,
                                 num_heads=cfg.num_heads, head_dim=cfg.head_dim)

    last_hidden = x                                                           # (B,S,H)

    # ---- pooler / topic head / topic CE: tiny (B,H) tensors -> plain JAX -------------------
    cls = last_hidden[:, 0, :]                                                # (B,H)
    pooler_output = jnp.tanh(cls @ params["pooler_w"] + params["pooler_b"])
    topic_logits = pooler_output @ params["topic_w"] + params["topic_b"]      # (B,10)

    # ---- generation head + CE fused in one kernel ------------------------------------------
    if labels is not None:
        labels3d = labels.reshape(B, S, 1).astype(jnp.int32)
    else:
        labels3d = jnp.zeros((B, S, 1), jnp.int32)
    generation_logits, gen_loss_sum, gen_valid = gen_head_ce_pallas(
        last_hidden, params["gen_w"], params["gen_b"], labels3d, ignore_index=-100)

    results = {"topic_logits": topic_logits, "generation_logits": generation_logits}
    if topic_label is not None and labels is not None:
        t_lse = jax.nn.logsumexp(topic_logits, axis=-1)
        t_picked = jnp.take_along_axis(topic_logits, topic_label[:, None], axis=-1)[:, 0]
        topic_loss = jnp.mean(t_lse - t_picked)           # all topic labels valid (PyTorch default)
        gen_loss = gen_loss_sum / gen_valid               # PyTorch 'mean': NaN if fully masked
        results["loss"] = topic_loss + gen_loss
    return results


# -----------------------------------------------------------------------------
if __name__ == "__main__":
    cfg = MiniConfig()
    B, S = 2, 8

    key = jax.random.PRNGKey(0)
    kp, k1, k2, k3, k4 = jax.random.split(key, 5)

    params = init_params(kp, cfg)

    input_ids = jax.random.randint(k1, (B, S), 0, cfg.vocab_size, dtype=jnp.int32)
    attention_mask = jnp.concatenate(
        [jnp.ones((B, S - 2), jnp.int32), jnp.zeros((B, 2), jnp.int32)], axis=1)
    token_type_ids = jax.random.randint(k2, (B, S), 0, cfg.type_vocab, dtype=jnp.int32)
    topic_label = jax.random.randint(k3, (B,), 0, cfg.num_topics, dtype=jnp.int32)
    labels = jax.random.randint(k4, (B, S), 0, cfg.vocab_size, dtype=jnp.int32)
    labels = labels.at[:, -2:].set(-100)   # ignored positions

    fwd = jax.jit(counseling_ai_forward, static_argnums=(1,))
    out = fwd(params, cfg, input_ids, attention_mask, token_type_ids,
              topic_label=topic_label, labels=labels)
    jax.block_until_ready(out)

    assert out["topic_logits"].shape == (B, cfg.num_topics)
    assert out["generation_logits"].shape == (B, S, cfg.vocab_size)
    assert out["loss"].shape == ()
    assert bool(jnp.isfinite(out["loss"]))
    print("KERNEL_OK")
</pallas_src>

<mosaic_0001>
module attributes {stable_mosaic.version = 11 : i64} {
  func.func @_encoder_layer_kernel(%arg0: i32, %arg1: memref<1x8x32xf32, #tpu.memory_space<vmem>>, %arg2: memref<1x1x8xf32, #tpu.memory_space<vmem>>, %arg3: memref<32x96xbf16, #tpu.memory_space<vmem>>, %arg4: memref<1x96xf32, #tpu.memory_space<vmem>>, %arg5: memref<32x32xbf16, #tpu.memory_space<vmem>>, %arg6: memref<1x32xf32, #tpu.memory_space<vmem>>, %arg7: memref<1x32xf32, #tpu.memory_space<vmem>>, %arg8: memref<1x32xf32, #tpu.memory_space<vmem>>, %arg9: memref<32x64xbf16, #tpu.memory_space<vmem>>, %arg10: memref<1x64xf32, #tpu.memory_space<vmem>>, %arg11: memref<64x32xbf16, #tpu.memory_space<vmem>>, %arg12: memref<1x32xf32, #tpu.memory_space<vmem>>, %arg13: memref<1x32xf32, #tpu.memory_space<vmem>>, %arg14: memref<1x32xf32, #tpu.memory_space<vmem>>, %arg15: memref<1x8x32xf32, #tpu.memory_space<vmem>>) attributes {dimension_semantics = [#tpu.dimension_semantics<parallel>], iteration_bounds = array<i64: 2>, scalar_prefetch = 0 : i64, scratch_operands = 0 : i64, tpu.core_type = #tpu.core_type<tc>, window_params = [{transform_indices = @transform_0, window_bounds = array<i64: 1, 8, 32>}, {transform_indices = @transform_1, window_bounds = array<i64: 1, 1, 8>}, {pipeline_mode = #tpu.pipeline_mode<synchronous>, transform_indices = @transform_2, window_bounds = array<i64: 32, 96>}, {pipeline_mode = #tpu.pipeline_mode<synchronous>, transform_indices = @transform_3, window_bounds = array<i64: 1, 96>}, {pipeline_mode = #tpu.pipeline_mode<synchronous>, transform_indices = @transform_4, window_bounds = array<i64: 32, 32>}, {pipeline_mode = #tpu.pipeline_mode<synchronous>, transform_indices = @transform_5, window_bounds = array<i64: 1, 32>}, {pipeline_mode = #tpu.pipeline_mode<synchronous>, transform_indices = @transform_6, window_bounds = array<i64: 1, 32>}, {pipeline_mode = #tpu.pipeline_mode<synchronous>, transform_indices = @transform_7, window_bounds = array<i64: 1, 32>}, {pipeline_mode = #tpu.pipeline_mode<synchronous>, transform_indices = @transform_8, window_bounds = array<i64: 32, 64>}, {pipeline_mode = #tpu.pipeline_mode<synchronous>, transform_indices = @transform_9, window_bounds = array<i64: 1, 64>}, {pipeline_mode = #tpu.pipeline_mode<synchronous>, transform_indices = @transform_10, window_bounds = array<i64: 64, 32>}, {pipeline_mode = #tpu.pipeline_mode<synchronous>, transform_indices = @transform_11, window_bounds = array<i64: 1, 32>}, {pipeline_mode = #tpu.pipeline_mode<synchronous>, transform_indices = @transform_12, window_bounds = array<i64: 1, 32>}, {pipeline_mode = #tpu.pipeline_mode<synchronous>, transform_indices = @transform_13, window_bounds = array<i64: 1, 32>}, {transform_indices = @transform_14, window_bounds = array<i64: 1, 8, 32>}]} {
    %c0 = arith.constant 0 : index
    %c0_0 = arith.constant 0 : index
    %c0_1 = arith.constant 0 : index
    %0 = vector.load %arg1[%c0, %c0_0, %c0_1] : memref<1x8x32xf32, #tpu.memory_space<vmem>>, vector<1x8x32xf32>
    %1 = vector.shape_cast %0 : vector<1x8x32xf32> to vector<8x32xf32>
    %c0_2 = arith.constant 0 : index
    %c0_3 = arith.constant 0 : index
    %c0_4 = arith.constant 0 : index
    %2 = vector.load %arg2[%c0_2, %c0_3, %c0_4] : memref<1x1x8xf32, #tpu.memory_space<vmem>>, vector<1x1x8xf32>
    %3 = vector.shape_cast %2 : vector<1x1x8xf32> to vector<1x8xf32>
    %cst = arith.constant 1.000000e+00 : f32
    %4 = vector.broadcast %cst : f32 to vector<1x8xf32>
    %5 = arith.subf %4, %3 : vector<1x8xf32>
    %cst_5 = arith.constant -1.000000e+09 : f32
    %6 = vector.broadcast %cst_5 : f32 to vector<1x8xf32>
    %7 = arith.mulf %5, %6 : vector<1x8xf32>
    %8 = arith.truncf %1 : vector<8x32xf32> to vector<8x32xbf16>
    %c0_6 = arith.constant 0 : index
    %c0_7 = arith.constant 0 : index
    %9 = vector.load %arg3[%c0_6, %c0_7] : memref<32x96xbf16, #tpu.memory_space<vmem>>, vector<32x96xbf16>
    %cst_8 = arith.constant dense<0.000000e+00> : vector<8x96xf32>
    %10 = tpu.matmul %8, %9, %cst_8 {dimension_numbers = #tpu.dot_dimension_numbers<[1], [0], [0], [1], [0, 0, 1, 1], [], []>} : vector<8x32xbf16>, vector<32x96xbf16>, vector<8x96xf32> -> vector<8x96xf32>
    %c0_9 = arith.constant 0 : index
    %c0_10 = arith.constant 0 : index
    %11 = vector.load %arg4[%c0_9, %c0_10] : memref<1x96xf32, #tpu.memory_space<vmem>>, vector<1x96xf32>
    %12 = vector.broadcast %11 : vector<1x96xf32> to vector<8x96xf32>
    %13 = arith.addf %10, %12 : vector<8x96xf32>
    %14 = vector.extract_strided_slice %13 {offsets = [0, 0], sizes = [8, 32], strides = [1, 1]} : vector<8x96xf32> to vector<8x32xf32>
    %15 = vector.extract_strided_slice %13 {offsets = [0, 32], sizes = [8, 32], strides = [1, 1]} : vector<8x96xf32> to vector<8x32xf32>
    %16 = vector.extract_strided_slice %13 {offsets = [0, 64], sizes = [8, 32], strides = [1, 1]} : vector<8x96xf32> to vector<8x32xf32>
    %cst_11 = arith.constant 0.000000e+00 : f32
    %17 = vector.broadcast %cst_11 : f32 to vector<8x32xf32>
    %18 = vector.extract_strided_slice %14 {offsets = [0, 0], sizes = [8, 16], strides = [1, 1]} : vector<8x32xf32> to vector<8x16xf32>
    %19 = vector.extract_strided_slice %15 {offsets = [0, 0], sizes = [8, 16], strides = [1, 1]} : vector<8x32xf32> to vector<8x16xf32>
    %20 = vector.extract_strided_slice %16 {offsets = [0, 0], sizes = [8, 16], strides = [1, 1]} : vector<8x32xf32> to vector<8x16xf32>
    %21 = tpu.transpose %19, [1, 0] : vector<8x16xf32> -> vector<16x8xf32>
    %cst_12 = arith.constant dense<0.000000e+00> : vector<8x8xf32>
    %22 = tpu.matmul %18, %21, %cst_12 {dimension_numbers = #tpu.dot_dimension_numbers<[1], [0], [0], [1], [0, 0, 1, 1], [], []>} : vector<8x16xf32>, vector<16x8xf32>, vector<8x8xf32> -> vector<8x8xf32>
    %cst_13 = arith.constant 2.500000e-01 : f32
    %23 = vector.broadcast %cst_13 : f32 to vector<8x8xf32>
    %24 = arith.mulf %22, %23 : vector<8x8xf32>
    %25 = vector.broadcast %7 : vector<1x8xf32> to vector<8x8xf32>
    %26 = arith.addf %24, %25 : vector<8x8xf32>
    %cst_14 = arith.constant dense<0xFF800000> : vector<8xf32>
    %27 = vector.multi_reduction <maximumf>, %26, %cst_14 [1] : vector<8x8xf32> to vector<8xf32>
    %28 = vector.shape_cast %27 : vector<8xf32> to vector<8x1xf32>
    %29 = vector.broadcast %28 : vector<8x1xf32> to vector<8x8xf32>
    %30 = arith.subf %26, %29 : vector<8x8xf32>
    %31 = math.exp %30 : vector<8x8xf32>
    %cst_15 = arith.constant dense<0.000000e+00> : vector<8xf32>
    %32 = vector.multi_reduction <add>, %31, %cst_15 [1] : vector<8x8xf32> to vector<8xf32>
    %33 = vector.shape_cast %32 : vector<8xf32> to vector<8x1xf32>
    %34 = vector.broadcast %33 : vector<8x1xf32> to vector<8x8xf32>
    %35 = arith.divf %31, %34 : vector<8x8xf32>
    %cst_16 = arith.constant dense<0.000000e+00> : vector<8x16xf32>
    %36 = tpu.matmul %35, %20, %cst_16 {dimension_numbers = #tpu.dot_dimension_numbers<[1], [0], [0], [1], [0, 0, 1, 1], [], []>} : vector<8x8xf32>, vector<8x16xf32>, vector<8x16xf32> -> vector<8x16xf32>
    %37 = arith.truncf %36 : vector<8x16xf32> to vector<8x16xbf16>
    %c0_17 = arith.constant 0 : index
    %c0_18 = arith.constant 0 : index
    %38 = vector.load %arg5[%c0_17, %c0_18] : memref<32x32xbf16, #tpu.memory_space<vmem>>, vector<16x32xbf16>
    %cst_19 = arith.constant dense<0.000000e+00> : vector<8x32xf32>
    %39 = tpu.matmul %37, %38, %cst_19 {dimension_numbers = #tpu.dot_dimension_numbers<[1], [0], [0], [1], [0, 0, 1, 1], [], []>} : vector<8x16xbf16>, vector<16x32xbf16>, vector<8x32xf32> -> vector<8x32xf32>
    %40 = arith.addf %17, %39 : vector<8x32xf32>
    %41 = vector.extract_strided_slice %14 {offsets = [0, 16], sizes = [8, 16], strides = [1, 1]} : vector<8x32xf32> to vector<8x16xf32>
    %42 = vector.extract_strided_slice %15 {offsets = [0, 16], sizes = [8, 16], strides = [1, 1]} : vector<8x32xf32> to vector<8x16xf32>
    %43 = vector.extract_strided_slice %16 {offsets = [0, 16], sizes = [8, 16], strides = [1, 1]} : vector<8x32xf32> to vector<8x16xf32>
    %44 = tpu.transpose %42, [1, 0] : vector<8x16xf32> -> vector<16x8xf32>
    %cst_20 = arith.constant dense<0.000000e+00> : vector<8x8xf32>
    %45 = tpu.matmul %41, %44, %cst_20 {dimension_numbers = #tpu.dot_dimension_numbers<[1], [0], [0], [1], [0, 0, 1, 1], [], []>} : vector<8x16xf32>, vector<16x8xf32>, vector<8x8xf32> -> vector<8x8xf32>
    %cst_21 = arith.constant 2.500000e-01 : f32
    %46 = vector.broadcast %cst_21 : f32 to vector<8x8xf32>
    %47 = arith.mulf %45, %46 : vector<8x8xf32>
    %48 = vector.broadcast %7 : vector<1x8xf32> to vector<8x8xf32>
    %49 = arith.addf %47, %48 : vector<8x8xf32>
    %cst_22 = arith.constant dense<0xFF800000> : vector<8xf32>
    %50 = vector.multi_reduction <maximumf>, %49, %cst_22 [1] : vector<8x8xf32> to vector<8xf32>
    %51 = vector.shape_cast %50 : vector<8xf32> to vector<8x1xf32>
    %52 = vector.broadcast %51 : vector<8x1xf32> to vector<8x8xf32>
    %53 = arith.subf %49, %52 : vector<8x8xf32>
    %54 = math.exp %53 : vector<8x8xf32>
    %cst_23 = arith.constant dense<0.000000e+00> : vector<8xf32>
    %55 = vector.multi_reduction <add>, %54, %cst_23 [1] : vector<8x8xf32> to vector<8xf32>
    %56 = vector.shape_cast %55 : vector<8xf32> to vector<8x1xf32>
    %57 = vector.broadcast %56 : vector<8x1xf32> to vector<8x8xf32>
    %58 = arith.divf %54, %57 : vector<8x8xf32>
    %cst_24 = arith.constant dense<0.000000e+00> : vector<8x16xf32>
    %59 = tpu.matmul %58, %43, %cst_24 {dimension_numbers = #tpu.dot_dimension_numbers<[1], [0], [0], [1], [0, 0, 1, 1], [], []>} : vector<8x8xf32>, vector<8x16xf32>, vector<8x16xf32> -> vector<8x16xf32>
    %60 = arith.truncf %59 : vector<8x16xf32> to vector<8x16xbf16>
    %c16 = arith.constant 16 : index
    %c0_25 = arith.constant 0 : index
    %61 = vector.load %arg5[%c16, %c0_25] : memref<32x32xbf16, #tpu.memory_space<vmem>>, vector<16x32xbf16>
    %cst_26 = arith.constant dense<0.000000e+00> : vector<8x32xf32>
    %62 = tpu.matmul %60, %61, %cst_26 {dimension_numbers = #tpu.dot_dimension_numbers<[1], [0], [0], [1], [0, 0, 1, 1], [], []>} : vector<8x16xbf16>, vector<16x32xbf16>, vector<8x32xf32> -> vector<8x32xf32>
    %63 = arith.addf %40, %62 : vector<8x32xf32>
    %c0_27 = arith.constant 0 : index
    %c0_28 = arith.constant 0 : index
    %64 = vector.load %arg6[%c0_27, %c0_28] : memref<1x32xf32, #tpu.memory_space<vmem>>, vector<1x32xf32>
    %65 = vector.broadcast %64 : vector<1x32xf32> to vector<8x32xf32>
    %66 = arith.addf %63, %65 : vector<8x32xf32>
    %67 = arith.addf %66, %1 : vector<8x32xf32>
    %c0_29 = arith.constant 0 : index
    %c0_30 = arith.constant 0 : index
    %68 = vector.load %arg7[%c0_29, %c0_30] : memref<1x32xf32, #tpu.memory_space<vmem>>, vector<1x32xf32>
    %c0_31 = arith.constant 0 : index
    %c0_32 = arith.constant 0 : index
    %69 = vector.load %arg8[%c0_31, %c0_32] : memref<1x32xf32, #tpu.memory_space<vmem>>, vector<1x32xf32>
    %cst_33 = arith.constant dense<0.000000e+00> : vector<8xf32>
    %70 = vector.multi_reduction <add>, %67, %cst_33 [1] : vector<8x32xf32> to vector<8xf32>
    %71 = vector.shape_cast %70 : vector<8xf32> to vector<8x1xf32>
    %cst_34 = arith.constant 3.200000e+01 : f32
    %72 = vector.broadcast %cst_34 : f32 to vector<8x1xf32>
    %73 = arith.divf %71, %72 : vector<8x1xf32>
    %74 = vector.broadcast %73 : vector<8x1xf32> to vector<8x32xf32>
    %75 = arith.subf %67, %74 : vector<8x32xf32>
    %76 = arith.mulf %75, %75 : vector<8x32xf32>
    %cst_35 = arith.constant dense<0.000000e+00> : vector<8xf32>
    %77 = vector.multi_reduction <add>, %76, %cst_35 [1] : vector<8x32xf32> to vector<8xf32>
    %78 = vector.shape_cast %77 : vector<8xf32> to vector<8x1xf32>
    %cst_36 = arith.constant 3.200000e+01 : f32
    %79 = vector.broadcast %cst_36 : f32 to vector<8x1xf32>
    %80 = arith.divf %78, %79 : vector<8x1xf32>
    %81 = vector.broadcast %73 : vector<8x1xf32> to vector<8x32xf32>
    %82 = arith.subf %67, %81 : vector<8x32xf32>
    %cst_37 = arith.constant 9.99999996E-13 : f32
    %83 = vector.broadcast %cst_37 : f32 to vector<8x1xf32>
    %84 = arith.addf %80, %83 : vector<8x1xf32>
    %85 = math.rsqrt %84 : vector<8x1xf32>
    %86 = vector.broadcast %85 : vector<8x1xf32> to vector<8x32xf32>
    %87 = arith.mulf %82, %86 : vector<8x32xf32>
    %88 = vector.broadcast %68 : vector<1x32xf32> to vector<8x32xf32>
    %89 = arith.mulf %87, %88 : vector<8x32xf32>
    %90 = vector.broadcast %69 : vector<1x32xf32> to vector<8x32xf32>
    %91 = arith.addf %89, %90 : vector<8x32xf32>
    %92 = arith.truncf %91 : vector<8x32xf32> to vector<8x32xbf16>
    %c0_38 = arith.constant 0 : index
    %c0_39 = arith.constant 0 : index
    %93 = vector.load %arg9[%c0_38, %c0_39] : memref<32x64xbf16, #tpu.memory_space<vmem>>, vector<32x64xbf16>
    %cst_40 = arith.constant dense<0.000000e+00> : vector<8x64xf32>
    %94 = tpu.matmul %92, %93, %cst_40 {dimension_numbers = #tpu.dot_dimension_numbers<[1], [0], [0], [1], [0, 0, 1, 1], [], []>} : vector<8x32xbf16>, vector<32x64xbf16>, vector<8x64xf32> -> vector<8x64xf32>
    %c0_41 = arith.constant 0 : index
    %c0_42 = arith.constant 0 : index
    %95 = vector.load %arg10[%c0_41, %c0_42] : memref<1x64xf32, #tpu.memory_space<vmem>>, vector<1x64xf32>
    %96 = vector.broadcast %95 : vector<1x64xf32> to vector<8x64xf32>
    %97 = arith.addf %94, %96 : vector<8x64xf32>
    %cst_43 = arith.constant 5.000000e-01 : f32
    %98 = vector.broadcast %cst_43 : f32 to vector<8x64xf32>
    %99 = arith.mulf %98, %97 : vector<8x64xf32>
    %cst_44 = arith.constant 4.471500e-02 : f32
    %100 = vector.broadcast %cst_44 : f32 to vector<8x64xf32>
    %101 = arith.mulf %100, %97 : vector<8x64xf32>
    %102 = arith.mulf %101, %97 : vector<8x64xf32>
    %103 = arith.mulf %102, %97 : vector<8x64xf32>
    %104 = arith.addf %97, %103 : vector<8x64xf32>
    %cst_45 = arith.constant 0.797884583 : f32
    %105 = vector.broadcast %cst_45 : f32 to vector<8x64xf32>
    %106 = arith.mulf %105, %104 : vector<8x64xf32>
    %107 = math.tanh %106 : vector<8x64xf32>
    %cst_46 = arith.constant 1.000000e+00 : f32
    %108 = vector.broadcast %cst_46 : f32 to vector<8x64xf32>
    %109 = arith.addf %108, %107 : vector<8x64xf32>
    %110 = arith.mulf %99, %109 : vector<8x64xf32>
    %111 = arith.truncf %110 : vector<8x64xf32> to vector<8x64xbf16>
    %c0_47 = arith.constant 0 : index
    %c0_48 = arith.constant 0 : index
    %112 = vector.load %arg11[%c0_47, %c0_48] : memref<64x32xbf16, #tpu.memory_space<vmem>>, vector<64x32xbf16>
    %cst_49 = arith.constant dense<0.000000e+00> : vector<8x32xf32>
    %113 = tpu.matmul %111, %112, %cst_49 {dimension_numbers = #tpu.dot_dimension_numbers<[1], [0], [0], [1], [0, 0, 1, 1], [], []>} : vector<8x64xbf16>, vector<64x32xbf16>, vector<8x32xf32> -> vector<8x32xf32>
    %c0_50 = arith.constant 0 : index
    %c0_51 = arith.constant 0 : index
    %114 = vector.load %arg12[%c0_50, %c0_51] : memref<1x32xf32, #tpu.memory_space<vmem>>, vector<1x32xf32>
    %115 = vector.broadcast %114 : vector<1x32xf32> to vector<8x32xf32>
    %116 = arith.addf %113, %115 : vector<8x32xf32>
    %117 = arith.addf %116, %91 : vector<8x32xf32>
    %c0_52 = arith.constant 0 : index
    %c0_53 = arith.constant 0 : index
    %118 = vector.load %arg13[%c0_52, %c0_53] : memref<1x32xf32, #tpu.memory_space<vmem>>, vector<1x32xf32>
    %c0_54 = arith.constant 0 : index
    %c0_55 = arith.constant 0 : index
    %119 = vector.load %arg14[%c0_54, %c0_55] : memref<1x32xf32, #tpu.memory_space<vmem>>, vector<1x32xf32>
    %cst_56 = arith.constant dense<0.000000e+00> : vector<8xf32>
    %120 = vector.multi_reduction <add>, %117, %cst_56 [1] : vector<8x32xf32> to vector<8xf32>
    %121 = vector.shape_cast %120 : vector<8xf32> to vector<8x1xf32>
    %cst_57 = arith.constant 3.200000e+01 : f32
    %122 = vector.broadcast %cst_57 : f32 to vector<8x1xf32>
    %123 = arith.divf %121, %122 : vector<8x1xf32>
    %124 = vector.broadcast %123 : vector<8x1xf32> to vector<8x32xf32>
    %125 = arith.subf %117, %124 : vector<8x32xf32>
    %126 = arith.mulf %125, %125 : vector<8x32xf32>
    %cst_58 = arith.constant dense<0.000000e+00> : vector<8xf32>
    %127 = vector.multi_reduction <add>, %126, %cst_58 [1] : vector<8x32xf32> to vector<8xf32>
    %128 = vector.shape_cast %127 : vector<8xf32> to vector<8x1xf32>
    %cst_59 = arith.constant 3.200000e+01 : f32
    %129 = vector.broadcast %cst_59 : f32 to vector<8x1xf32>
    %130 = arith.divf %128, %129 : vector<8x1xf32>
    %131 = vector.broadcast %123 : vector<8x1xf32> to vector<8x32xf32>
    %132 = arith.subf %117, %131 : vector<8x32xf32>
    %cst_60 = arith.constant 9.99999996E-13 : f32
    %133 = vector.broadcast %cst_60 : f32 to vector<8x1xf32>
    %134 = arith.addf %130, %133 : vector<8x1xf32>
    %135 = math.rsqrt %134 : vector<8x1xf32>
    %136 = vector.broadcast %135 : vector<8x1xf32> to vector<8x32xf32>
    %137 = arith.mulf %132, %136 : vector<8x32xf32>
    %138 = vector.broadcast %118 : vector<1x32xf32> to vector<8x32xf32>
    %139 = arith.mulf %137, %138 : vector<8x32xf32>
    %140 = vector.broadcast %119 : vector<1x32xf32> to vector<8x32xf32>
    %141 = arith.addf %139, %140 : vector<8x32xf32>
    %c0_61 = arith.constant 0 : index
    %c0_62 = arith.constant 0 : index
    %c0_63 = arith.constant 0 : index
    %142 = vector.load %arg15[%c0_61, %c0_62, %c0_63] : memref<1x8x32xf32, #tpu.memory_space<vmem>>, vector<1x8x32xf32>
    %143 = vector.shape_cast %142 : vector<1x8x32xf32> to vector<8x32xf32>
    %144 = vector.shape_cast %141 : vector<8x32xf32> to vector<1x8x32xf32>
    tpu.vector_store %arg15[%c0_61, %c0_62, %c0_63], %144 {strides = array<i32>} : memref<1x8x32xf32, #tpu.memory_space<vmem>>, vector<1x8x32xf32>,
    return
  }
  func.func @transform_0(%arg0: i32) -> (i32, i32, i32) {
    %c0_i32 = arith.constant 0 : i32
    %c0_i32_0 = arith.constant 0 : i32
    %c0_i32_1 = arith.constant 0 : i32
    return %arg0, %c0_i32, %c0_i32_0 : i32, i32, i32
  }
  func.func @transform_1(%arg0: i32) -> (i32, i32, i32) {
    %c0_i32 = arith.constant 0 : i32
    %c0_i32_0 = arith.constant 0 : i32
    %c0_i32_1 = arith.constant 0 : i32
    return %arg0, %c0_i32, %c0_i32_0 : i32, i32, i32
  }
  func.func @transform_2(%arg0: i32) -> (i32, i32) {
    %c0_i32 = arith.constant 0 : i32
    %c0_i32_0 = arith.constant 0 : i32
    %c0_i32_1 = arith.constant 0 : i32
    return %c0_i32, %c0_i32_0 : i32, i32
  }
  func.func @transform_3(%arg0: i32) -> (i32, i32) {
    %c0_i32 = arith.constant 0 : i32
    %c0_i32_0 = arith.constant 0 : i32
    %c0_i32_1 = arith.constant 0 : i32
    return %c0_i32, %c0_i32_0 : i32, i32
  }
  func.func @transform_4(%arg0: i32) -> (i32, i32) {
    %c0_i32 = arith.constant 0 : i32
    %c0_i32_0 = arith.constant 0 : i32
    %c0_i32_1 = arith.constant 0 : i32
    return %c0_i32, %c0_i32_0 : i32, i32
  }
  func.func @transform_5(%arg0: i32) -> (i32, i32) {
    %c0_i32 = arith.constant 0 : i32
    %c0_i32_0 = arith.constant 0 : i32
    %c0_i32_1 = arith.constant 0 : i32
    return %c0_i32, %c0_i32_0 : i32, i32
  }
  func.func @transform_6(%arg0: i32) -> (i32, i32) {
    %c0_i32 = arith.constant 0 : i32
    %c0_i32_0 = arith.constant 0 : i32
    %c0_i32_1 = arith.constant 0 : i32
    return %c0_i32, %c0_i32_0 : i32, i32
  }
  func.func @transform_7(%arg0: i32) -> (i32, i32) {
    %c0_i32 = arith.constant 0 : i32
    %c0_i32_0 = arith.constant 0 : i32
    %c0_i32_1 = arith.constant 0 : i32
    return %c0_i32, %c0_i32_0 : i32, i32
  }
  func.func @transform_8(%arg0: i32) -> (i32, i32) {
    %c0_i32 = arith.constant 0 : i32
    %c0_i32_0 = arith.constant 0 : i32
    %c0_i32_1 = arith.constant 0 : i32
    return %c0_i32, %c0_i32_0 : i32, i32
  }
  func.func @transform_9(%arg0: i32) -> (i32, i32) {
    %c0_i32 = arith.constant 0 : i32
    %c0_i32_0 = arith.constant 0 : i32
    %c0_i32_1 = arith.constant 0 : i32
    return %c0_i32, %c0_i32_0 : i32, i32
  }
  func.func @transform_10(%arg0: i32) -> (i32, i32) {
    %c0_i32 = arith.constant 0 : i32
    %c0_i32_0 = arith.constant 0 : i32
    %c0_i32_1 = arith.constant 0 : i32
    return %c0_i32, %c0_i32_0 : i32, i32
  }
  func.func @transform_11(%arg0: i32) -> (i32, i32) {
    %c0_i32 = arith.constant 0 : i32
    %c0_i32_0 = arith.constant 0 : i32
    %c0_i32_1 = arith.constant 0 : i32
    return %c0_i32, %c0_i32_0 : i32, i32
  }
  func.func @transform_12(%arg0: i32) -> (i32, i32) {
    %c0_i32 = arith.constant 0 : i32
    %c0_i32_0 = arith.constant 0 : i32
    %c0_i32_1 = arith.constant 0 : i32
    return %c0_i32, %c0_i32_0 : i32, i32
  }
  func.func @transform_13(%arg0: i32) -> (i32, i32) {
    %c0_i32 = arith.constant 0 : i32
    %c0_i32_0 = arith.constant 0 : i32
    %c0_i32_1 = arith.constant 0 : i32
    return %c0_i32, %c0_i32_0 : i32, i32
  }
  func.func @transform_14(%arg0: i32) -> (i32, i32, i32) {
    %c0_i32 = arith.constant 0 : i32
    %c0_i32_0 = arith.constant 0 : i32
    %c0_i32_1 = arith.constant 0 : i32
    return %arg0, %c0_i32, %c0_i32_0 : i32, i32, i32
  }
}

module attributes {stable_mosaic.version = 11 : i64} {
  func.func @_emb_ln_kernel(%arg0: i32, %arg1: memref<1x8x32xf32, #tpu.memory_space<vmem>>, %arg2: memref<1x32xf32, #tpu.memory_space<vmem>>, %arg3: memref<1x32xf32, #tpu.memory_space<vmem>>, %arg4: memref<1x8x32xf32, #tpu.memory_space<vmem>>) attributes {dimension_semantics = [#tpu.dimension_semantics<parallel>], iteration_bounds = array<i64: 2>, scalar_prefetch = 0 : i64, scratch_operands = 0 : i64, tpu.core_type = #tpu.core_type<tc>, window_params = [{transform_indices = @transform_0, window_bounds = array<i64: 1, 8, 32>}, {pipeline_mode = #tpu.pipeline_mode<synchronous>, transform_indices = @transform_1, window_bounds = array<i64: 1, 32>}, {pipeline_mode = #tpu.pipeline_mode<synchronous>, transform_indices = @transform_2, window_bounds = array<i64: 1, 32>}, {transform_indices = @transform_3, window_bounds = array<i64: 1, 8, 32>}]} {
    %c0 = arith.constant 0 : index
    %c0_0 = arith.constant 0 : index
    %c0_1 = arith.constant 0 : index
    %0 = vector.load %arg1[%c0, %c0_0, %c0_1] : memref<1x8x32xf32, #tpu.memory_space<vmem>>, vector<1x8x32xf32>
    %1 = vector.shape_cast %0 : vector<1x8x32xf32> to vector<8x32xf32>
    %c0_2 = arith.constant 0 : index
    %c0_3 = arith.constant 0 : index
    %2 = vector.load %arg2[%c0_2, %c0_3] : memref<1x32xf32, #tpu.memory_space<vmem>>, vector<1x32xf32>
    %c0_4 = arith.constant 0 : index
    %c0_5 = arith.constant 0 : index
    %3 = vector.load %arg3[%c0_4, %c0_5] : memref<1x32xf32, #tpu.memory_space<vmem>>, vector<1x32xf32>
    %cst = arith.constant dense<0.000000e+00> : vector<8xf32>
    %4 = vector.multi_reduction <add>, %1, %cst [1] : vector<8x32xf32> to vector<8xf32>
    %5 = vector.shape_cast %4 : vector<8xf32> to vector<8x1xf32>
    %cst_6 = arith.constant 3.200000e+01 : f32
    %6 = vector.broadcast %cst_6 : f32 to vector<8x1xf32>
    %7 = arith.divf %5, %6 : vector<8x1xf32>
    %8 = vector.broadcast %7 : vector<8x1xf32> to vector<8x32xf32>
    %9 = arith.subf %1, %8 : vector<8x32xf32>
    %10 = arith.mulf %9, %9 : vector<8x32xf32>
    %cst_7 = arith.constant dense<0.000000e+00> : vector<8xf32>
    %11 = vector.multi_reduction <add>, %10, %cst_7 [1] : vector<8x32xf32> to vector<8xf32>
    %12 = vector.shape_cast %11 : vector<8xf32> to vector<8x1xf32>
    %cst_8 = arith.constant 3.200000e+01 : f32
    %13 = vector.broadcast %cst_8 : f32 to vector<8x1xf32>
    %14 = arith.divf %12, %13 : vector<8x1xf32>
    %15 = vector.broadcast %7 : vector<8x1xf32> to vector<8x32xf32>
    %16 = arith.subf %1, %15 : vector<8x32xf32>
    %cst_9 = arith.constant 9.99999996E-13 : f32
    %17 = vector.broadcast %cst_9 : f32 to vector<8x1xf32>
    %18 = arith.addf %14, %17 : vector<8x1xf32>
    %19 = math.rsqrt %18 : vector<8x1xf32>
    %20 = vector.broadcast %19 : vector<8x1xf32> to vector<8x32xf32>
    %21 = arith.mulf %16, %20 : vector<8x32xf32>
    %22 = vector.broadcast %2 : vector<1x32xf32> to vector<8x32xf32>
    %23 = arith.mulf %21, %22 : vector<8x32xf32>
    %24 = vector.broadcast %3 : vector<1x32xf32> to vector<8x32xf32>
    %25 = arith.addf %23, %24 : vector<8x32xf32>
    %c0_10 = arith.constant 0 : index
    %c0_11 = arith.constant 0 : index
    %c0_12 = arith.constant 0 : index
    %26 = vector.load %arg4[%c0_10, %c0_11, %c0_12] : memref<1x8x32xf32, #tpu.memory_space<vmem>>, vector<1x8x32xf32>
    %27 = vector.shape_cast %26 : vector<1x8x32xf32> to vector<8x32xf32>
    %28 = vector.shape_cast %25 : vector<8x32xf32> to vector<1x8x32xf32>
    tpu.vector_store %arg4[%c0_10, %c0_11, %c0_12], %28 {strides = array<i32>} : memref<1x8x32xf32, #tpu.memory_space<vmem>>, vector<1x8x32xf32>,
    return
  }
  func.func @transform_0(%arg0: i32) -> (i32, i32, i32) {
    %c0_i32 = arith.constant 0 : i32
    %c0_i32_0 = arith.constant 0 : i32
    %c0_i32_1 = arith.constant 0 : i32
    return %arg0, %c0_i32, %c0_i32_0 : i32, i32, i32
  }
  func.func @transform_1(%arg0: i32) -> (i32, i32) {
    %c0_i32 = arith.constant 0 : i32
    %c0_i32_0 = arith.constant 0 : i32
    %c0_i32_1 = arith.constant 0 : i32
    return %c0_i32, %c0_i32_0 : i32, i32
  }
  func.func @transform_2(%arg0: i32) -> (i32, i32) {
    %c0_i32 = arith.constant 0 : i32
    %c0_i32_0 = arith.constant 0 : i32
    %c0_i32_1 = arith.constant 0 : i32
    return %c0_i32, %c0_i32_0 : i32, i32
  }
  func.func @transform_3(%arg0: i32) -> (i32, i32, i32) {
    %c0_i32 = arith.constant 0 : i32
    %c0_i32_0 = arith.constant 0 : i32
    %c0_i32_1 = arith.constant 0 : i32
    return %arg0, %c0_i32, %c0_i32_0 : i32, i32, i32
  }
}

module attributes {stable_mosaic.version = 11 : i64} {
  func.func @_gen_head_ce_kernel(%arg0: i32, %arg1: memref<1x8x32xf32, #tpu.memory_space<vmem>>, %arg2: memref<32x64xbf16, #tpu.memory_space<vmem>>, %arg3: memref<1x64xf32, #tpu.memory_space<vmem>>, %arg4: memref<1x8x1xi32, #tpu.memory_space<vmem>>, %arg5: memref<1x8x64xf32, #tpu.memory_space<vmem>>, %arg6: memref<1x1x1xf32, #tpu.memory_space<vmem>>, %arg7: memref<1x1x1xf32, #tpu.memory_space<vmem>>) attributes {dimension_semantics = [#tpu.dimension_semantics<parallel>], iteration_bounds = array<i64: 2>, scalar_prefetch = 0 : i64, scratch_operands = 0 : i64, tpu.core_type = #tpu.core_type<tc>, window_params = [{transform_indices = @transform_0, window_bounds = array<i64: 1, 8, 32>}, {pipeline_mode = #tpu.pipeline_mode<synchronous>, transform_indices = @transform_1, window_bounds = array<i64: 32, 64>}, {pipeline_mode = #tpu.pipeline_mode<synchronous>, transform_indices = @transform_2, window_bounds = array<i64: 1, 64>}, {transform_indices = @transform_3, window_bounds = array<i64: 1, 8, 1>}, {transform_indices = @transform_4, window_bounds = array<i64: 1, 8, 64>}, {transform_indices = @transform_5, window_bounds = array<i64: 1, 1, 1>}, {transform_indices = @transform_6, window_bounds = array<i64: 1, 1, 1>}]} {
    %c0 = arith.constant 0 : index
    %c0_0 = arith.constant 0 : index
    %c0_1 = arith.constant 0 : index
    %0 = vector.load %arg1[%c0, %c0_0, %c0_1] : memref<1x8x32xf32, #tpu.memory_space<vmem>>, vector<1x8x32xf32>
    %1 = vector.shape_cast %0 : vector<1x8x32xf32> to vector<8x32xf32>
    %2 = arith.truncf %1 : vector<8x32xf32> to vector<8x32xbf16>
    %c0_2 = arith.constant 0 : index
    %c0_3 = arith.constant 0 : index
    %3 = vector.load %arg2[%c0_2, %c0_3] : memref<32x64xbf16, #tpu.memory_space<vmem>>, vector<32x64xbf16>
    %cst = arith.constant dense<0.000000e+00> : vector<8x64xf32>
    %4 = tpu.matmul %2, %3, %cst {dimension_numbers = #tpu.dot_dimension_numbers<[1], [0], [0], [1], [0, 0, 1, 1], [], []>} : vector<8x32xbf16>, vector<32x64xbf16>, vector<8x64xf32> -> vector<8x64xf32>
    %c0_4 = arith.constant 0 : index
    %c0_5 = arith.constant 0 : index
    %5 = vector.load %arg3[%c0_4, %c0_5] : memref<1x64xf32, #tpu.memory_space<vmem>>, vector<1x64xf32>
    %6 = vector.broadcast %5 : vector<1x64xf32> to vector<8x64xf32>
    %7 = arith.addf %4, %6 : vector<8x64xf32>
    %c0_6 = arith.constant 0 : index
    %c0_7 = arith.constant 0 : index
    %c0_8 = arith.constant 0 : index
    %8 = vector.load %arg5[%c0_6, %c0_7, %c0_8] : memref<1x8x64xf32, #tpu.memory_space<vmem>>, vector<1x8x64xf32>
    %9 = vector.shape_cast %8 : vector<1x8x64xf32> to vector<8x64xf32>
    %10 = vector.shape_cast %7 : vector<8x64xf32> to vector<1x8x64xf32>
    tpu.vector_store %arg5[%c0_6, %c0_7, %c0_8], %10 {strides = array<i32>} : memref<1x8x64xf32, #tpu.memory_space<vmem>>, vector<1x8x64xf32>,
    %c0_9 = arith.constant 0 : index
    %c0_10 = arith.constant 0 : index
    %c0_11 = arith.constant 0 : index
    %11 = vector.load %arg4[%c0_9, %c0_10, %c0_11] : memref<1x8x1xi32, #tpu.memory_space<vmem>>, vector<1x8x1xi32>
    %12 = vector.shape_cast %11 : vector<1x8x1xi32> to vector<8x1xi32>
    %cst_12 = arith.constant dense<0xFF800000> : vector<8xf32>
    %13 = vector.multi_reduction <maximumf>, %7, %cst_12 [1] : vector<8x64xf32> to vector<8xf32>
    %14 = vector.shape_cast %13 : vector<8xf32> to vector<8x1xf32>
    %15 = vector.broadcast %14 : vector<8x1xf32> to vector<8x64xf32>
    %16 = arith.subf %7, %15 : vector<8x64xf32>
    %17 = math.exp %16 : vector<8x64xf32>
    %cst_13 = arith.constant dense<0.000000e+00> : vector<8xf32>
    %18 = vector.multi_reduction <add>, %17, %cst_13 [1] : vector<8x64xf32> to vector<8xf32>
    %19 = vector.shape_cast %18 : vector<8xf32> to vector<8x1xf32>
    %20 = math.log %19 : vector<8x1xf32>
    %21 = arith.addf %20, %14 : vector<8x1xf32>
    %22 = tpu.iota {dimensions = array<i32: 1>} : vector<8x64xi32>
    %23 = vector.broadcast %12 : vector<8x1xi32> to vector<8x64xi32>
    %24 = arith.cmpi eq, %22, %23 : vector<8x64xi32>
    %cst_14 = arith.constant 0.000000e+00 : f32
    %25 = vector.broadcast %cst_14 : f32 to vector<8x64xf32>
    %26 = arith.select %24, %7, %25 : vector<8x64xi1>, vector<8x64xf32>
    %cst_15 = arith.constant dense<0.000000e+00> : vector<8xf32>
    %27 = vector.multi_reduction <add>, %26, %cst_15 [1] : vector<8x64xf32> to vector<8xf32>
    %28 = vector.shape_cast %27 : vector<8xf32> to vector<8x1xf32>
    %c-100_i32 = arith.constant -100 : i32
    %29 = vector.broadcast %c-100_i32 : i32 to vector<8x1xi32>
    %30 = arith.cmpi ne, %12, %29 : vector<8x1xi32>
    %31 = arith.extui %30 : vector<8x1xi1> to vector<8x1xi32>
    %32 = arith.sitofp %31 : vector<8x1xi32> to vector<8x1xf32>
    %33 = arith.subf %21, %28 : vector<8x1xf32>
    %34 = arith.mulf %33, %32 : vector<8x1xf32>
    %cst_16 = arith.constant dense<0.000000e+00> : vector<1xf32>
    %35 = vector.multi_reduction <add>, %34, %cst_16 [0] : vector<8x1xf32> to vector<1xf32>
    %36 = vector.shape_cast %35 : vector<1xf32> to vector<1x1xf32>
    %c0_17 = arith.constant 0 : index
    %c0_18 = arith.constant 0 : index
    %c0_19 = arith.constant 0 : index
    %37 = vector.load %arg6[%c0_17, %c0_18, %c0_19] : memref<1x1x1xf32, #tpu.memory_space<vmem>>, vector<1x1x1xf32>
    %38 = vector.shape_cast %37 : vector<1x1x1xf32> to vector<1x1xf32>
    %39 = vector.shape_cast %36 : vector<1x1xf32> to vector<1x1x1xf32>
    tpu.vector_store %arg6[%c0_17, %c0_18, %c0_19], %39 {strides = array<i32>} : memref<1x1x1xf32, #tpu.memory_space<vmem>>, vector<1x1x1xf32>,
    %cst_20 = arith.constant dense<0.000000e+00> : vector<1xf32>
    %40 = vector.multi_reduction <add>, %32, %cst_20 [0] : vector<8x1xf32> to vector<1xf32>
    %41 = vector.shape_cast %40 : vector<1xf32> to vector<1x1xf32>
    %c0_21 = arith.constant 0 : index
    %c0_22 = arith.constant 0 : index
    %c0_23 = arith.constant 0 : index
    %42 = vector.load %arg7[%c0_21, %c0_22, %c0_23] : memref<1x1x1xf32, #tpu.memory_space<vmem>>, vector<1x1x1xf32>
    %43 = vector.shape_cast %42 : vector<1x1x1xf32> to vector<1x1xf32>
    %44 = vector.shape_cast %41 : vector<1x1xf32> to vector<1x1x1xf32>
    tpu.vector_store %arg7[%c0_21, %c0_22, %c0_23], %44 {strides = array<i32>} : memref<1x1x1xf32, #tpu.memory_space<vmem>>, vector<1x1x1xf32>,
    return
  }
  func.func @transform_0(%arg0: i32) -> (i32, i32, i32) {
    %c0_i32 = arith.constant 0 : i32
    %c0_i32_0 = arith.constant 0 : i32
    %c0_i32_1 = arith.constant 0 : i32
    return %arg0, %c0_i32, %c0_i32_0 : i32, i32, i32
  }
  func.func @transform_1(%arg0: i32) -> (i32, i32) {
    %c0_i32 = arith.constant 0 : i32
    %c0_i32_0 = arith.constant 0 : i32
    %c0_i32_1 = arith.constant 0 : i32
    return %c0_i32, %c0_i32_0 : i32, i32
  }
  func.func @transform_2(%arg0: i32) -> (i32, i32) {
    %c0_i32 = arith.constant 0 : i32
    %c0_i32_0 = arith.constant 0 : i32
    %c0_i32_1 = arith.constant 0 : i32
    return %c0_i32, %c0_i32_0 : i32, i32
  }
  func.func @transform_3(%arg0: i32) -> (i32, i32, i32) {
    %c0_i32 = arith.constant 0 : i32
    %c0_i32_0 = arith.constant 0 : i32
    %c0_i32_1 = arith.constant 0 : i32
    return %arg0, %c0_i32, %c0_i32_0 : i32, i32, i32
  }
  func.func @transform_4(%arg0: i32) -> (i32, i32, i32) {
    %c0_i32 = arith.constant 0 : i32
    %c0_i32_0 = arith.constant 0 : i32
    %c0_i32_1 = arith.constant 0 : i32
    return %arg0, %c0_i32, %c0_i32_0 : i32, i32, i32
  }
  func.func @transform_5(%arg0: i32) -> (i32, i32, i32) {
    %c0_i32 = arith.constant 0 : i32
    %c0_i32_0 = arith.constant 0 : i32
    %c0_i32_1 = arith.constant 0 : i32
    return %arg0, %c0_i32, %c0_i32_0 : i32, i32, i32
  }
  func.func @transform_6(%arg0: i32) -> (i32, i32, i32) {
    %c0_i32 = arith.constant 0 : i32
    %c0_i32_0 = arith.constant 0 : i32
    %c0_i32_1 = arith.constant 0 : i32
    return %arg0, %c0_i32, %c0_i32_0 : i32, i32, i32
  }
}

</mosaic_0001>

<llo_original>
// kernel: counseling_ai_forward.4
$region0: #{counseling_ai_forward.4}
  #allocation0 [shape = 'u32[]', space=smem, size = 0x4, offset = 0x4, fixed_abs, tag = 'smem constant byte address 0x4 - core index']
  #allocation1 [shape = 'u32[144,128]{1,0:T(1,128)}', space=vmem, size = 0x12000, scoped, tag = 'internal scratch']
  %s0 = inlined_call_operand.vmem [shape: f32[2,8,32], index: 0, kind: input, shape index: {}]
  %s1 = inlined_call_operand.vmem [shape: f32[1,32], index: 1, kind: input, shape index: {}]
  %s2 = inlined_call_operand.vmem [shape: f32[1,32], index: 2, kind: input, shape index: {}]
  %s3 = inlined_call_operand.vmem [shape: f32[2,8,32], index: 3, kind: output, shape index: {}]
  %s4 = sld [smem:[#allocation0]]
  $region45: #{counseling_ai_forward.4} parent=0
    _
  %s6 = ssub.s32 1, %s4
  %s7 = scalar_select 0, %s6, %s4
  loop: start=0, step=1, limit=4
  $region2: #{counseling_ai_forward.4} parent=0 // loop_pre_header
    _
  $region3: #{counseling_ai_forward.4} parent=0 // loop_header
    %s9 = sphi 0, %s13
    %p10 = scmp.ge.s32.totalorder %s9, 4
    %s19 = sphi 0, %s21
    %s22 = sphi 0, %s19
    %s23 = sphi 0, %s22
    %s39 = sphi 0, %s23
    %s43 = sphi 0, %s43
    %s45 = sphi 0, %s43
    %s46 = sphi 0, %s45
    %s60 = sphi 0, %s46
    %s64 = sphi 0, %s64
    %s66 = sphi 0, %s64
    %s67 = sphi 0, %s66
    %s81 = sphi 0, %s67
    %s87 = sphi 0, %s89
    %s90 = sphi 0, %s87
    %s91 = sphi 0, %s90
    %s107 = sphi 0, %s91
  $region4: #{counseling_ai_forward.4} parent=0 // loop_header_branch
    %12 = sbr.rel (%p10) target = $region8
  $region5: #{counseling_ai_forward.4} parent=0 // loop_body
    %s14 = ssub.s32 %s9, 1
    %s15 = ssub.s32 %s9, 2
    %s16 = sadd.s32 %s9, 1
    %s17 = ssub.s32 %s9, %s16
    %p18 = scmp.eq.s32.totalorder %s17, 0
    %s20 = sadd.s32 %s19, 1
    %s21 = scalar_select %p18, %s19, %s20
    %p24 = pneg %p18
    %p25 = scmp.eq.s32.totalorder %s9, 1
    %p26 = por %p24, %p25
    %p27 = scmp.ne.s32.totalorder %s19, %s22
    %p28 = scmp.eq.s32.totalorder %s9, 0
    %p29 = por %p27, %p28
    %p30 = scmp.ne.s32.totalorder %s19, %s22
    %p31 = scmp.eq.s32.totalorder %s14, 1
    %p32 = por %p30, %p31
    %p33 = scmp.ne.s32.totalorder %s22, %s23
    %p34 = scmp.eq.s32.totalorder %s14, 0
    %p35 = por %p33, %p34
    %p36 = scmp.ne.s32.totalorder %s22, %s23
    %p37 = scmp.eq.s32.totalorder %s15, 1
    %p38 = por %p36, %p37
    %p40 = scmp.ne.s32.totalorder %s23, %s39
    %p41 = scmp.eq.s32.totalorder %s15, 0
    %p42 = por %p40, %p41
    %s44 = sadd.s32 %s43, 1
    %p47 = scmp.eq.s32.totalorder %s9, 1
    %p48 = scmp.ne.s32.totalorder %s43, %s45
    %p49 = scmp.eq.s32.totalorder %s9, 0
    %p50 = por %p48, %p49
    %p51 = scmp.ne.s32.totalorder %s43, %s45
    %p52 = scmp.eq.s32.totalorder %s14, 1
    %p53 = por %p51, %p52
    %p54 = scmp.ne.s32.totalorder %s45, %s46
    %p55 = scmp.eq.s32.totalorder %s14, 0
    %p56 = por %p54, %p55
    %p57 = scmp.ne.s32.totalorder %s45, %s46
    %p58 = scmp.eq.s32.totalorder %s15, 1
    %p59 = por %p57, %p58
    %p61 = scmp.ne.s32.totalorder %s46, %s60
    %p62 = scmp.eq.s32.totalorder %s15, 0
    %p63 = por %p61, %p62
    %s65 = sadd.s32 %s64, 1
    %p68 = scmp.eq.s32.totalorder %s9, 1
    %p69 = scmp.ne.s32.totalorder %s64, %s66
    %p70 = scmp.eq.s32.totalorder %s9, 0
    %p71 = por %p69, %p70
    %p72 = scmp.ne.s32.totalorder %s64, %s66
    %p73 = scmp.eq.s32.totalorder %s14, 1
    %p74 = por %p72, %p73
    %p75 = scmp.ne.s32.totalorder %s66, %s67
    %p76 = scmp.eq.s32.totalorder %s14, 0
    %p77 = por %p75, %p76
    %p78 = scmp.ne.s32.totalorder %s66, %s67
    %p79 = scmp.eq.s32.totalorder %s15, 1
    %p80 = por %p78, %p79
    %p82 = scmp.ne.s32.totalorder %s67, %s81
    %p83 = scmp.eq.s32.totalorder %s15, 0
    %p84 = por %p82, %p83
    %s85 = ssub.s32 %s9, %s16
    %p86 = scmp.eq.s32.totalorder %s85, 0
    %s88 = sadd.s32 %s87, 1
    %s89 = scalar_select %p86, %s87, %s88
    %p92 = pneg %p86
    %p93 = scmp.eq.s32.totalorder %s9, 1
    %p94 = por %p92, %p93
    %p95 = scmp.ne.s32.totalorder %s87, %s90
    %p96 = scmp.eq.s32.totalorder %s9, 0
    %p97 = por %p95, %p96
    %p98 = scmp.ne.s32.totalorder %s87, %s90
    %p99 = scmp.eq.s32.totalorder %s14, 1
    %p100 = por %p98, %p99
    %p101 = scmp.ne.s32.totalorder %s90, %s91
    %p102 = scmp.eq.s32.totalorder %s14, 0
    %p103 = por %p101, %p102
    %p104 = scmp.ne.s32.totalorder %s90, %s91
    %p105 = scmp.eq.s32.totalorder %s15, 1
    %p106 = por %p104, %p105
    %p108 = scmp.ne.s32.totalorder %s91, %s107
    %p109 = scmp.eq.s32.totalorder %s15, 0
    %p110 = por %p108, %p109
    %p111 = scmp.le.s32.totalorder 1, %s9
    %p112 = scmp.lt.s32.totalorder %s9, 3
    %p113 = pnand %p111, %p112
    %p114 = pneg %p113
    // Predicated region
    $region9: #{counseling_ai_forward.4} parent=5 // pred_check
      _
    $region10: #{counseling_ai_forward.4} parent=5 // pred_check_branch
      %116 = sbr.rel (%p113) target = $region12
    $region11: #{counseling_ai_forward.4} parent=5 // pred_region
      %s117 = ssub.s32 %s9, 1
      // Predicated region
      $region13: #{counseling_ai_forward.4} parent=11 // pred_check
        %p118 = pneg %p56
      $region14: #{counseling_ai_forward.4} parent=11 // pred_check_branch
        %120 = sbr.rel (%p118) target = $region16
      $region15: #{counseling_ai_forward.4} parent=11 // pred_region
        _
      $region16: #{counseling_ai_forward.4} parent=11 // pred_fallthru
        _
      // Predicated region
      $region17: #{counseling_ai_forward.4} parent=11 // pred_check
        %p121 = pneg %p77
      $region18: #{counseling_ai_forward.4} parent=11 // pred_check_branch
        %123 = sbr.rel (%p121) target = $region20
      $region19: #{counseling_ai_forward.4} parent=11 // pred_region
        _
      $region20: #{counseling_ai_forward.4} parent=11 // pred_fallthru
        _
    $region12: #{counseling_ai_forward.4} parent=5 // pred_fallthru
      _
    %p124 = scmp.lt.s32.totalorder %s9, 2
    // Predicated region
    $region21: #{counseling_ai_forward.4} parent=5 // pred_check
      %p125 = pneg %p124
    $region22: #{counseling_ai_forward.4} parent=5 // pred_check_branch
      %127 = sbr.rel (%p125) target = $region24
    $region23: #{counseling_ai_forward.4} parent=5 // pred_region
      // Predicated region
      $region25: #{counseling_ai_forward.4} parent=23 // pred_check
        %p128 = pneg %p29
      $region26: #{counseling_ai_forward.4} parent=23 // pred_check_branch
        %130 = sbr.rel (%p128) target = $region28
      $region27: #{counseling_ai_forward.4} parent=23 // pred_region
        %p131 = scmp.lt.s32.totalorder %s9, 1
        %s132 = scalar_select %p131, %s9, 1
        %s133 = smul.addr %s132, 8
        %s134 = scalar_lea.vmem %s0, %s133
      $region28: #{counseling_ai_forward.4} parent=23 // pred_fallthru
        _
    $region24: #{counseling_ai_forward.4} parent=5 // pred_fallthru
      _
    %p135 = scmp.le.s32.totalorder 1, %s9
    %p136 = scmp.lt.s32.totalorder %s9, 3
    %p137 = pnand %p135, %p136
    %p138 = pneg %p137
    // Predicated region
    $region29: #{counseling_ai_forward.4} parent=5 // pred_check
      _
    $region30: #{counseling_ai_forward.4} parent=5 // pred_check_branch
      %140 = sbr.rel (%p137) target = $region32
    $region31: #{counseling_ai_forward.4} parent=5 // pred_region
      %s141 = ssub.s32 %s9, 1
      %p142 = scmp.lt.s32.totalorder %s14, 1
      %s143 = scalar_select %p142, %s14, 1
      %s144 = smul.addr %s143, 8
      %s145 = scalar_lea.vmem %s0, %s144
      %p146 = pneg %p35
      %p147 = pneg %p32
      %p148 = pneg %p56
      %p149 = pneg %p53
      %p150 = pneg %p77
      %p151 = pneg %p74
      %p152 = pneg %p103
      %p153 = pneg %p100
      %p154 = scmp.lt.s32.totalorder %s14, 1
      %s155 = scalar_select %p154, %s14, 1
      %s156 = smul.addr %s155, 8
      %s157 = scalar_lea.vmem %s3, %s156
      %p158 = scmp.lt.s32.totalorder %s14, 1
      %s159 = scalar_select %p158, %s14, 1
      %s160 = smul.addr %s159, 8
      %s161 = scalar_lea.vmem %s0, %s160
      %p162 = scmp.lt.s32.totalorder %s14, 1
      %s163 = scalar_select %p162, %s14, 1
      %s164 = smul.addr %s163, 8
      %s165 = scalar_lea.vmem %s3, %s164
      %v166 = vld [vmem:[%s161] sm:$0xff]
      %v167 = vld [vmem:[%s1] sm:$0x1]
      %v168 = vld [vmem:[%s2] sm:$0x1]
      %vm169 = vcmask 261120
      %v170 = vsel %vm169, %v166, 0.0
      %171 = vadd.xlane.f32.xlu0 %v170
      %v172 = vpop.xlane.xlu0 %171
      %v173 = vrcp.pop 32.0
      %v174 = vmul.f32 %v172, %v173
      %v175 = vsub.f32 %v166, %v174
      %v176 = vmul.f32 %v175, %v175
      %v177 = vsel %vm169, %v176, 0.0
      %178 = vadd.xlane.f32.xlu0 %v177
      %v179 = vpop.xlane.xlu0 %178
      %v180 = vmul.f32 %v179, %v173
      %v181 = vadd.f32 %v180, 1e-12
      %v182 = vrsqrt.pop %v181
      %v183 = vmul.f32 %v175, %v182
      %v185 = vlaneseq
      %v186 = vshrl.u32 %v185, 7
      %v187 = vsub.s32 0, %v186
      %v188 = vrot.slane %v167, %v187
      %v190 = vmul.f32 %v183, %v188
      %v192 = vlaneseq
      %v193 = vshrl.u32 %v192, 7
      %v194 = vsub.s32 0, %v193
      %v195 = vrot.slane %v168, %v194
      %v197 = vadd.f32 %v190, %v195
      %198 = vst.msk [vmem:[%s165] sm:$0xff] %vm169, %v197
      %p199 = scmp.lt.s32.totalorder %s14, 1
      %s200 = scalar_select %p199, %s14, 1
      %s201 = smul.addr %s200, 8
      %s202 = scalar_lea.vmem %s3, %s201
      // Predicated region
      $region33: #{counseling_ai_forward.4} parent=31 // pred_check
        %p203 = pneg %p100
      $region34: #{counseling_ai_forward.4} parent=31 // pred_check_branch
        %205 = sbr.rel (%p203) target = $region36
      $region35: #{counseling_ai_forward.4} parent=31 // pred_region
        _
      $region36: #{counseling_ai_forward.4} parent=31 // pred_fallthru
        _
    $region32: #{counseling_ai_forward.4} parent=5 // pred_fallthru
      _
    %p206 = scmp.le.s32.totalorder 2, %s9
    // Predicated region
    $region37: #{counseling_ai_forward.4} parent=5 // pred_check
      %p207 = pneg %p206
    $region38: #{counseling_ai_forward.4} parent=5 // pred_check_branch
      %209 = sbr.rel (%p207) target = $region40
    $region39: #{counseling_ai_forward.4} parent=5 // pred_region
      %s210 = ssub.s32 %s9, 2
      // Predicated region
      $region41: #{counseling_ai_forward.4} parent=39 // pred_check
        %p211 = pneg %p106
      $region42: #{counseling_ai_forward.4} parent=39 // pred_check_branch
        %213 = sbr.rel (%p211) target = $region44
      $region43: #{counseling_ai_forward.4} parent=39 // pred_region
        %p214 = scmp.lt.s32.totalorder %s15, 1
        %s215 = scalar_select %p214, %s15, 1
        %s216 = smul.addr %s215, 8
        %s217 = scalar_lea.vmem %s3, %s216
      $region44: #{counseling_ai_forward.4} parent=39 // pred_fallthru
        _
    $region40: #{counseling_ai_forward.4} parent=5 // pred_fallthru
      _
  $region6: #{counseling_ai_forward.4} parent=0 // loop_footer
    %s13 = sadd.s32 1, %s9
  $region7: #{counseling_ai_forward.4} parent=0 // loop_footer_branch
    %8 = sbr.rel target = $region3
  $region8: #{counseling_ai_forward.4} parent=0 // loop_exit
    _

// kernel: counseling_ai_forward.5
$region0: #{counseling_ai_forward.5}
  #allocation0 [shape = 'u32[]', space=smem, size = 0x4, offset = 0x4, fixed_abs, tag = 'smem constant byte address 0x4 - core index']
  #allocation1 [shape = 'u32[144,128]{1,0:T(1,128)}', space=vmem, size = 0x12000, scoped, tag = 'internal scratch']
  %s0 = inlined_call_operand.vmem [shape: f32[2,8,32], index: 0, kind: input, shape index: {}]
  %s1 = inlined_call_operand.vmem [shape: f32[2,1,8], index: 1, kind: input, shape index: {}]
  %s2 = inlined_call_operand.vmem [shape: bf16[32,96], index: 2, kind: input, shape index: {}]
  %s3 = inlined_call_operand.vmem [shape: f32[1,96], index: 3, kind: input, shape index: {}]
  %s4 = inlined_call_operand.vmem [shape: bf16[32,32], index: 4, kind: input, shape index: {}]
  %s5 = inlined_call_operand.vmem [shape: f32[1,32], index: 5, kind: input, shape index: {}]
  %s6 = inlined_call_operand.vmem [shape: f32[1,32], index: 6, kind: input, shape index: {}]
  %s7 = inlined_call_operand.vmem [shape: f32[1,32], index: 7, kind: input, shape index: {}]
  %s8 = inlined_call_operand.vmem [shape: bf16[32,64], index: 8, kind: input, shape index: {}]
  %s9 = inlined_call_operand.vmem [shape: f32[1,64], index: 9, kind: input, shape index: {}]
  %s10 = inlined_call_operand.vmem [shape: bf16[64,32], index: 10, kind: input, shape index: {}]
  %s11 = inlined_call_operand.vmem [shape: f32[1,32], index: 11, kind: input, shape index: {}]
  %s12 = inlined_call_operand.vmem [shape: f32[1,32], index: 12, kind: input, shape index: {}]
  %s13 = inlined_call_operand.vmem [shape: f32[1,32], index: 13, kind: input, shape index: {}]
  %s14 = inlined_call_operand.vmem [shape: f32[2,8,32], index: 14, kind: output, shape index: {}]
  %s15 = sld [smem:[#allocation0]]
  $region89: #{counseling_ai_forward.5} parent=0
    _
  %s17 = ssub.s32 1, %s15
  %s18 = scalar_select 0, %s17, %s15
  loop: start=0, step=1, limit=4
  $region2: #{counseling_ai_forward.5} parent=0 // loop_pre_header
    _
  $region3: #{counseling_ai_forward.5} parent=0 // loop_header
    %s20 = sphi 0, %s24
    %p21 = scmp.ge.s32.totalorder %s20, 4
    %s30 = sphi 0, %s32
    %s33 = sphi 0, %s30
    %s34 = sphi 0, %s33
    %s50 = sphi 0, %s34
    %s56 = sphi 0, %s58
    %s59 = sphi 0, %s56
    %s60 = sphi 0, %s59
    %s76 = sphi 0, %s60
    %s80 = sphi 0, %s80
    %s82 = sphi 0, %s80
    %s83 = sphi 0, %s82
    %s97 = sphi 0, %s83
    %s101 = sphi 0, %s101
    %s103 = sphi 0, %s101
    %s104 = sphi 0, %s103
    %s118 = sphi 0, %s104
    %s122 = sphi 0, %s122
    %s124 = sphi 0, %s122
    %s125 = sphi 0, %s124
    %s139 = sphi 0, %s125
    %s143 = sphi 0, %s143
    %s145 = sphi 0, %s143
    %s146 = sphi 0, %s145
    %s160 = sphi 0, %s146
    %s164 = sphi 0, %s164
    %s166 = sphi 0, %s164
    %s167 = sphi 0, %s166
    %s181 = sphi 0, %s167
    %s185 = sphi 0, %s185
    %s187 = sphi 0, %s185
    %s188 = sphi 0, %s187
    %s202 = sphi 0, %s188
    %s206 = sphi 0, %s206
    %s208 = sphi 0, %s206
    %s209 = sphi 0, %s208
    %s223 = sphi 0, %s209
    %s227 = sphi 0, %s227
    %s229 = sphi 0, %s227
    %s230 = sphi 0, %s229
    %s244 = sphi 0, %s230
    %s248 = sphi 0, %s248
    %s250 = sphi 0, %s248
    %s251 = sphi 0, %s250
    %s265 = sphi 0, %s251
    %s269 = sphi 0, %s269
    %s271 = sphi 0, %s269
    %s272 = sphi 0, %s271
    %s286 = sphi 0, %s272
    %s290 = sphi 0, %s290
    %s292 = sphi 0, %s290
    %s293 = sphi 0, %s292
    %s307 = sphi 0, %s293
    %s311 = sphi 0, %s311
    %s313 = sphi 0, %s311
    %s314 = sphi 0, %s313
    %s328 = sphi 0, %s314
    %s334 = sphi 0, %s336
    %s337 = sphi 0, %s334
    %s338 = sphi 0, %s337
    %s354 = sphi 0, %s338
  $region4: #{counseling_ai_forward.5} parent=0 // loop_header_branch
    %23 = sbr.rel (%p21) target = $region8
  $region5: #{counseling_ai_forward.5} parent=0 // loop_body
    %s25 = ssub.s32 %s20, 1
    %s26 = ssub.s32 %s20, 2
    %s27 = sadd.s32 %s20, 1
    %s28 = ssub.s32 %s20, %s27
    %p29 = scmp.eq.s32.totalorder %s28, 0
    %s31 = sadd.s32 %s30, 1
    %s32 = scalar_select %p29, %s30, %s31
    %p35 = pneg %p29
    %p36 = scmp.eq.s32.totalorder %s20, 1
    %p37 = por %p35, %p36
    %p38 = scmp.ne.s32.totalorder %s30, %s33
    %p39 = scmp.eq.s32.totalorder %s20, 0
    %p40 = por %p38, %p39
    %p41 = scmp.ne.s32.totalorder %s30, %s33
    %p42 = scmp.eq.s32.totalorder %s25, 1
    %p43 = por %p41, %p42
    %p44 = scmp.ne.s32.totalorder %s33, %s34
    %p45 = scmp.eq.s32.totalorder %s25, 0
    %p46 = por %p44, %p45
    %p47 = scmp.ne.s32.totalorder %s33, %s34
    %p48 = scmp.eq.s32.totalorder %s26, 1
    %p49 = por %p47, %p48
    %p51 = scmp.ne.s32.totalorder %s34, %s50
    %p52 = scmp.eq.s32.totalorder %s26, 0
    %p53 = por %p51, %p52
    %s54 = ssub.s32 %s20, %s27
    %p55 = scmp.eq.s32.totalorder %s54, 0
    %s57 = sadd.s32 %s56, 1
    %s58 = scalar_select %p55, %s56, %s57
    %p61 = pneg %p55
    %p62 = scmp.eq.s32.totalorder %s20, 1
    %p63 = por %p61, %p62
    %p64 = scmp.ne.s32.totalorder %s56, %s59
    %p65 = scmp.eq.s32.totalorder %s20, 0
    %p66 = por %p64, %p65
    %p67 = scmp.ne.s32.totalorder %s56, %s59
    %p68 = scmp.eq.s32.totalorder %s25, 1
    %p69 = por %p67, %p68
    %p70 = scmp.ne.s32.totalorder %s59, %s60
    %p71 = scmp.eq.s32.totalorder %s25, 0
    %p72 = por %p70, %p71
    %p73 = scmp.ne.s32.totalorder %s59, %s60
    %p74 = scmp.eq.s32.totalorder %s26, 1
    %p75 = por %p73, %p74
    %p77 = scmp.ne.s32.totalorder %s60, %s76
    %p78 = scmp.eq.s32.totalorder %s26, 0
    %p79 = por %p77, %p78
    %s81 = sadd.s32 %s80, 1
    %p84 = scmp.eq.s32.totalorder %s20, 1
    %p85 = scmp.ne.s32.totalorder %s80, %s82
    %p86 = scmp.eq.s32.totalorder %s20, 0
    %p87 = por %p85, %p86
    %p88 = scmp.ne.s32.totalorder %s80, %s82
    %p89 = scmp.eq.s32.totalorder %s25, 1
    %p90 = por %p88, %p89
    %p91 = scmp.ne.s32.totalorder %s82, %s83
    %p92 = scmp.eq.s32.totalorder %s25, 0
    %p93 = por %p91, %p92
    %p94 = scmp.ne.s32.totalorder %s82, %s83
    %p95 = scmp.eq.s32.totalorder %s26, 1
    %p96 = por %p94, %p95
    %p98 = scmp.ne.s32.totalorder %s83, %s97
    %p99 = scmp.eq.s32.totalorder %s26, 0
    %p100 = por %p98, %p99
    %s102 = sadd.s32 %s101, 1
    %p105 = scmp.eq.s32.totalorder %s20, 1
    %p106 = scmp.ne.s32.totalorder %s101, %s103
    %p107 = scmp.eq.s32.totalorder %s20, 0
    %p108 = por %p106, %p107
    %p109 = scmp.ne.s32.totalorder %s101, %s103
    %p110 = scmp.eq.s32.totalorder %s25, 1
    %p111 = por %p109, %p110
    %p112 = scmp.ne.s32.totalorder %s103, %s104
    %p113 = scmp.eq.s32.totalorder %s25, 0
    %p114 = por %p112, %p113
    %p115 = scmp.ne.s32.totalorder %s103, %s104
    %p116 = scmp.eq.s32.totalorder %s26, 1
    %p117 = por %p115, %p116
    %p119 = scmp.ne.s32.totalorder %s104, %s118
    %p120 = scmp.eq.s32.totalorder %s26, 0
    %p121 = por %p119, %p120
    %s123 = sadd.s32 %s122, 1
    %p126 = scmp.eq.s32.totalorder %s20, 1
    %p127 = scmp.ne.s32.totalorder %s122, %s124
    %p128 = scmp.eq.s32.totalorder %s20, 0
    %p129 = por %p127, %p128
    %p130 = scmp.ne.s32.totalorder %s122, %s124
    %p131 = scmp.eq.s32.totalorder %s25, 1
    %p132 = por %p130, %p131
    %p133 = scmp.ne.s32.totalorder %s124, %s125
    %p134 = scmp.eq.s32.totalorder %s25, 0
    %p135 = por %p133, %p134
    %p136 = scmp.ne.s32.totalorder %s124, %s125
    %p137 = scmp.eq.s32.totalorder %s26, 1
    %p138 = por %p136, %p137
    %p140 = scmp.ne.s32.totalorder %s125, %s139
    %p141 = scmp.eq.s32.totalorder %s26, 0
    %p142 = por %p140, %p141
    %s144 = sadd.s32 %s143, 1
    %p147 = scmp.eq.s32.totalorder %s20, 1
    %p148 = scmp.ne.s32.totalorder %s143, %s145
    %p149 = scmp.eq.s32.totalorder %s20, 0
    %p150 = por %p148, %p149
    %p151 = scmp.ne.s32.totalorder %s143, %s145
    %p152 = scmp.eq.s32.totalorder %s25, 1
    %p153 = por %p151, %p152
    %p154 = scmp.ne.s32.totalorder %s145, %s146
    %p155 = scmp.eq.s32.totalorder %s25, 0
    %p156 = por %p154, %p155
    %p157 = scmp.ne.s32.totalorder %s145, %s146
    %p158 = scmp.eq.s32.totalorder %s26, 1
    %p159 = por %p157, %p158
    %p161 = scmp.ne.s32.totalorder %s146, %s160
    %p162 = scmp.eq.s32.totalorder %s26, 0
    %p163 = por %p161, %p162
    %s165 = sadd.s32 %s164, 1
    %p168 = scmp.eq.s32.totalorder %s20, 1
    %p169 = scmp.ne.s32.totalorder %s164, %s166
    %p170 = scmp.eq.s32.totalorder %s20, 0
    %p171 = por %p169, %p170
    %p172 = scmp.ne.s32.totalorder %s164, %s166
    %p173 = scmp.eq.s32.totalorder %s25, 1
    %p174 = por %p172, %p173
    %p175 = scmp.ne.s32.totalorder %s166, %s167
    %p176 = scmp.eq.s32.totalorder %s25, 0
    %p177 = por %p175, %p176
    %p178 = scmp.ne.s32.totalorder %s166, %s167
    %p179 = scmp.eq.s32.totalorder %s26, 1
    %p180 = por %p178, %p179
    %p182 = scmp.ne.s32.totalorder %s167, %s181
    %p183 = scmp.eq.s32.totalorder %s26, 0
    %p184 = por %p182, %p183
    %s186 = sadd.s32 %s185, 1
    %p189 = scmp.eq.s32.totalorder %s20, 1
    %p190 = scmp.ne.s32.totalorder %s185, %s187
    %p191 = scmp.eq.s32.totalorder %s20, 0
    %p192 = por %p190, %p191
    %p193 = scmp.ne.s32.totalorder %s185, %s187
    %p194 = scmp.eq.s32.totalorder %s25, 1
    %p195 = por %p193, %p194
    %p196 = scmp.ne.s32.totalorder %s187, %s188
    %p197 = scmp.eq.s32.totalorder %s25, 0
    %p198 = por %p196, %p197
    %p199 = scmp.ne.s32.totalorder %s187, %s188
    %p200 = scmp.eq.s32.totalorder %s26, 1
    %p201 = por %p199, %p200
    %p203 = scmp.ne.s32.totalorder %s188, %s202
    %p204 = scmp.eq.s32.totalorder %s26, 0
    %p205 = por %p203, %p204
    %s207 = sadd.s32 %s206, 1
    %p210 = scmp.eq.s32.totalorder %s20, 1
    %p211 = scmp.ne.s32.totalorder %s206, %s208
    %p212 = scmp.eq.s32.totalorder %s20, 0
    %p213 = por %p211, %p212
    %p214 = scmp.ne.s32.totalorder %s206, %s208
    %p215 = scmp.eq.s32.totalorder %s25, 1
    %p216 = por %p214, %p215
    %p217 = scmp.ne.s32.totalorder %s208, %s209
    %p218 = scmp.eq.s32.totalorder %s25, 0
    %p219 = por %p217, %p218
    %p220 = scmp.ne.s32.totalorder %s208, %s209
    %p221 = scmp.eq.s32.totalorder %s26, 1
    %p222 = por %p220, %p221
    %p224 = scmp.ne.s32.totalorder %s209, %s223
    %p225 = scmp.eq.s32.totalorder %s26, 0
    %p226 = por %p224, %p225
    %s228 = sadd.s32 %s227, 1
    %p231 = scmp.eq.s32.totalorder %s20, 1
    %p232 = scmp.ne.s32.totalorder %s227, %s229
    %p233 = scmp.eq.s32.totalorder %s20, 0
    %p234 = por %p232, %p233
    %p235 = scmp.ne.s32.totalorder %s227, %s229
    %p236 = scmp.eq.s32.totalorder %s25, 1
    %p237 = por %p235, %p236
    %p238 = scmp.ne.s32.totalorder %s229, %s230
    %p239 = scmp.eq.s32.totalorder %s25, 0
    %p240 = por %p238, %p239
    %p241 = scmp.ne.s32.totalorder %s229, %s230
    %p242 = scmp.eq.s32.totalorder %s26, 1
    %p243 = por %p241, %p242
    %p245 = scmp.ne.s32.totalorder %s230, %s244
    %p246 = scmp.eq.s32.totalorder %s26, 0
    %p247 = por %p245, %p246
    %s249 = sadd.s32 %s248, 1
    %p252 = scmp.eq.s32.totalorder %s20, 1
    %p253 = scmp.ne.s32.totalorder %s248, %s250
    %p254 = scmp.eq.s32.totalorder %s20, 0
    %p255 = por %p253, %p254
    %p256 = scmp.ne.s32.totalorder %s248, %s250
    %p257 = scmp.eq.s32.totalorder %s25, 1
    %p258 = por %p256, %p257
    %p259 = scmp.ne.s32.totalorder %s250, %s251
    %p260 = scmp.eq.s32.totalorder %s25, 0
    %p261 = por %p259, %p260
    %p262 = scmp.ne.s32.totalorder %s250, %s251
    %p263 = scmp.eq.s32.totalorder %s26, 1
    %p264 = por %p262, %p263
    %p266 = scmp.ne.s32.totalorder %s251, %s265
    %p267 = scmp.eq.s32.totalorder %s26, 0
    %p268 = por %p266, %p267
    %s270 = sadd.s32 %s269, 1
    %p273 = scmp.eq.s32.totalorder %s20, 1
    %p274 = scmp.ne.s32.totalorder %s269, %s271
    %p275 = scmp.eq.s32.totalorder %s20, 0
    %p276 = por %p274, %p275
    %p277 = scmp.ne.s32.totalorder %s269, %s271
    %p278 = scmp.eq.s32.totalorder %s25, 1
    %p279 = por %p277, %p278
    %p280 = scmp.ne.s32.totalorder %s271, %s272
    %p281 = scmp.eq.s32.totalorder %s25, 0
    %p282 = por %p280, %p281
    %p283 = scmp.ne.s32.totalorder %s271, %s272
    %p284 = scmp.eq.s32.totalorder %s26, 1
    %p285 = por %p283, %p284
    %p287 = scmp.ne.s32.totalorder %s272, %s286
    %p288 = scmp.eq.s32.totalorder %s26, 0
    %p289 = por %p287, %p288
    %s291 = sadd.s32 %s290, 1
    %p294 = scmp.eq.s32.totalorder %s20, 1
    %p295 = scmp.ne.s32.totalorder %s290, %s292
    %p296 = scmp.eq.s32.totalorder %s20, 0
    %p297 = por %p295, %p296
    %p298 = scmp.ne.s32.totalorder %s290, %s292
    %p299 = scmp.eq.s32.totalorder %s25, 1
    %p300 = por %p298, %p299
    %p301 = scmp.ne.s32.totalorder %s292, %s293
    %p302 = scmp.eq.s32.totalorder %s25, 0
    %p303 = por %p301, %p302
    %p304 = scmp.ne.s32.totalorder %s292, %s293
    %p305 = scmp.eq.s32.totalorder %s26, 1
    %p306 = por %p304, %p305
    %p308 = scmp.ne.s32.totalorder %s293, %s307
    %p309 = scmp.eq.s32.totalorder %s26, 0
    %p310 = por %p308, %p309
    %s312 = sadd.s32 %s311, 1
    %p315 = scmp.eq.s32.totalorder %s20, 1
    %p316 = scmp.ne.s32.totalorder %s311, %s313
    %p317 = scmp.eq.s32.totalorder %s20, 0
    %p318 = por %p316, %p317
    %p319 = scmp.ne.s32.totalorder %s311, %s313
    %p320 = scmp.eq.s32.totalorder %s25, 1
    %p321 = por %p319, %p320
    %p322 = scmp.ne.s32.totalorder %s313, %s314
    %p323 = scmp.eq.s32.totalorder %s25, 0
    %p324 = por %p322, %p323
    %p325 = scmp.ne.s32.totalorder %s313, %s314
    %p326 = scmp.eq.s32.totalorder %s26, 1
    %p327 = por %p325, %p326
    %p329 = scmp.ne.s32.totalorder %s314, %s328
    %p330 = scmp.eq.s32.totalorder %s26, 0
    %p331 = por %p329, %p330
    %s332 = ssub.s32 %s20, %s27
    %p333 = scmp.eq.s32.totalorder %s332, 0
    %s335 = sadd.s32 %s334, 1
    %s336 = scalar_select %p333, %s334, %s335
    %p339 = pneg %p333
    %p340 = scmp.eq.s32.totalorder %s20, 1
    %p341 = por %p339, %p340
    %p342 = scmp.ne.s32.totalorder %s334, %s337
    %p343 = scmp.eq.s32.totalorder %s20, 0
    %p344 = por %p342, %p343
    %p345 = scmp.ne.s32.totalorder %s334, %s337
    %p346 = scmp.eq.s32.totalorder %s25, 1
    %p347 = por %p345, %p346
    %p348 = scmp.ne.s32.totalorder %s337, %s338
    %p349 = scmp.eq.s32.totalorder %s25, 0
    %p350 = por %p348, %p349
    %p351 = scmp.ne.s32.totalorder %s337, %s338
    %p352 = scmp.eq.s32.totalorder %s26, 1
    %p353 = por %p351, %p352
    %p355 = scmp.ne.s32.totalorder %s338, %s354
    %p356 = scmp.eq.s32.totalorder %s26, 0
    %p357 = por %p355, %p356
    %p358 = scmp.le.s32.totalorder 1, %s20
    %p359 = scmp.lt.s32.totalorder %s20, 3
    %p360 = pnand %p358, %p359
    %p361 = pneg %p360
    // Predicated region
    $region9: #{counseling_ai_forward.5} parent=5 // pred_check
      _
    $region10: #{counseling_ai_forward.5} parent=5 // pred_check_branch
      %363 = sbr.rel (%p360) target = $region12
    $region11: #{counseling_ai_forward.5} parent=5 // pred_region
      %s364 = ssub.s32 %s20, 1
      // Predicated region
      $region13: #{counseling_ai_forward.5} parent=11 // pred_check
        %p365 = pneg %p93
      $region14: #{counseling_ai_forward.5} parent=11 // pred_check_branch
        %367 = sbr.rel (%p365) target = $region16
      $region15: #{counseling_ai_forward.5} parent=11 // pred_region
        _
      $region16: #{counseling_ai_forward.5} parent=11 // pred_fallthru
        _
      // Predicated region
      $region17: #{counseling_ai_forward.5} parent=11 // pred_check
        %p368 = pneg %p114
      $region18: #{counseling_ai_forward.5} parent=11 // pred_check_branch
        %370 = sbr.rel (%p368) target = $region20
      $region19: #{counseling_ai_forward.5} parent=11 // pred_region
        _
      $region20: #{counseling_ai_forward.5} parent=11 // pred_fallthru
        _
      // Predicated region
      $region21: #{counseling_ai_forward.5} parent=11 // pred_check
        %p371 = pneg %p135
      $region22: #{counseling_ai_forward.5} parent=11 // pred_check_branch
        %373 = sbr.rel (%p371) target = $region24
      $region23: #{counseling_ai_forward.5} parent=11 // pred_region
        _
      $region24: #{counseling_ai_forward.5} parent=11 // pred_fallthru
        _
      // Predicated region
      $region25: #{counseling_ai_forward.5} parent=11 // pred_check
        %p374 = pneg %p156
      $region26: #{counseling_ai_forward.5} parent=11 // pred_check_branch
        %376 = sbr.rel (%p374) target = $region28
      $region27: #{counseling_ai_forward.5} parent=11 // pred_region
        _
      $region28: #{counseling_ai_forward.5} parent=11 // pred_fallthru
        _
      // Predicated region
      $region29: #{counseling_ai_forward.5} parent=11 // pred_check
        %p377 = pneg %p177
      $region30: #{counseling_ai_forward.5} parent=11 // pred_check_branch
        %379 = sbr.rel (%p377) target = $region32
      $region31: #{counseling_ai_forward.5} parent=11 // pred_region
        _
      $region32: #{counseling_ai_forward.5} parent=11 // pred_fallthru
        _
      // Predicated region
      $region33: #{counseling_ai_forward.5} parent=11 // pred_check
        %p380 = pneg %p198
      $region34: #{counseling_ai_forward.5} parent=11 // pred_check_branch
        %382 = sbr.rel (%p380) target = $region36
      $region35: #{counseling_ai_forward.5} parent=11 // pred_region
        _
      $region36: #{counseling_ai_forward.5} parent=11 // pred_fallthru
        _
      // Predicated region
      $region37: #{counseling_ai_forward.5} parent=11 // pred_check
        %p383 = pneg %p219
      $region38: #{counseling_ai_forward.5} parent=11 // pred_check_branch
        %385 = sbr.rel (%p383) target = $region40
      $region39: #{counseling_ai_forward.5} parent=11 // pred_region
        _
      $region40: #{counseling_ai_forward.5} parent=11 // pred_fallthru
        _
      // Predicated region
      $region41: #{counseling_ai_forward.5} parent=11 // pred_check
        %p386 = pneg %p240
      $region42: #{counseling_ai_forward.5} parent=11 // pred_check_branch
        %388 = sbr.rel (%p386) target = $region44
      $region43: #{counseling_ai_forward.5} parent=11 // pred_region
        _
      $region44: #{counseling_ai_forward.5} parent=11 // pred_fallthru
        _
      // Predicated region
      $region45: #{counseling_ai_forward.5} parent=11 // pred_check
        %p389 = pneg %p261
      $region46: #{counseling_ai_forward.5} parent=11 // pred_check_branch
        %391 = sbr.rel (%p389) target = $region48
      $region47: #{counseling_ai_forward.5} parent=11 // pred_region
        _
      $region48: #{counseling_ai_forward.5} parent=11 // pred_fallthru
        _
      // Predicated region
      $region49: #{counseling_ai_forward.5} parent=11 // pred_check
        %p392 = pneg %p282
      $region50: #{counseling_ai_forward.5} parent=11 // pred_check_branch
        %394 = sbr.rel (%p392) target = $region52
      $region51: #{counseling_ai_forward.5} parent=11 // pred_region
        _
      $region52: #{counseling_ai_forward.5} parent=11 // pred_fallthru
        _
      // Predicated region
      $region53: #{counseling_ai_forward.5} parent=11 // pred_check
        %p395 = pneg %p303
      $region54: #{counseling_ai_forward.5} parent=11 // pred_check_branch
        %397 = sbr.rel (%p395) target = $region56
      $region55: #{counseling_ai_forward.5} parent=11 // pred_region
        _
      $region56: #{counseling_ai_forward.5} parent=11 // pred_fallthru
        _
      // Predicated region
      $region57: #{counseling_ai_forward.5} parent=11 // pred_check
        %p398 = pneg %p324
      $region58: #{counseling_ai_forward.5} parent=11 // pred_check_branch
        %400 = sbr.rel (%p398) target = $region60
      $region59: #{counseling_ai_forward.5} parent=11 // pred_region
        _
      $region60: #{counseling_ai_forward.5} parent=11 // pred_fallthru
        _
    $region12: #{counseling_ai_forward.5} parent=5 // pred_fallthru
      _
    %p401 = scmp.lt.s32.totalorder %s20, 2
    // Predicated region
    $region61: #{counseling_ai_forward.5} parent=5 // pred_check
      %p402 = pneg %p401
    $region62: #{counseling_ai_forward.5} parent=5 // pred_check_branch
      %404 = sbr.rel (%p402) target = $region64
    $region63: #{counseling_ai_forward.5} parent=5 // pred_region
      // Predicated region
      $region65: #{counseling_ai_forward.5} parent=63 // pred_check
        %p405 = pneg %p40
      $region66: #{counseling_ai_forward.5} parent=63 // pred_check_branch
        %407 = sbr.rel (%p405) target = $region68
      $region67: #{counseling_ai_forward.5} parent=63 // pred_region
        %p408 = scmp.lt.s32.totalorder %s20, 1
        %s409 = scalar_select %p408, %s20, 1
        %s410 = smul.addr %s409, 8
        %s411 = scalar_lea.vmem %s0, %s410
      $region68: #{counseling_ai_forward.5} parent=63 // pred_fallthru
        _
      // Predicated region
      $region69: #{counseling_ai_forward.5} parent=63 // pred_check
        %p412 = pneg %p66
      $region70: #{counseling_ai_forward.5} parent=63 // pred_check_branch
        %414 = sbr.rel (%p412) target = $region72
      $region71: #{counseling_ai_forward.5} parent=63 // pred_region
        %p415 = scmp.lt.s32.totalorder %s20, 1
        %s416 = scalar_select %p415, %s20, 1
        %s417 = scalar_lea.vmem %s1, %s416
      $region72: #{counseling_ai_forward.5} parent=63 // pred_fallthru
        _
    $region64: #{counseling_ai_forward.5} parent=5 // pred_fallthru
      _
    %p418 = scmp.le.s32.totalorder 1, %s20
    %p419 = scmp.lt.s32.totalorder %s20, 3
    %p420 = pnand %p418, %p419
    %p421 = pneg %p420
    // Predicated region
    $region73: #{counseling_ai_forward.5} parent=5 // pred_check
      _
    $region74: #{counseling_ai_forward.5} parent=5 // pred_check_branch
      %423 = sbr.rel (%p420) target = $region76
    $region75: #{counseling_ai_forward.5} parent=5 // pred_region
      %s424 = ssub.s32 %s20, 1
      %p425 = scmp.lt.s32.totalorder %s25, 1
      %s426 = scalar_select %p425, %s25, 1
      %s427 = smul.addr %s426, 8
      %s428 = scalar_lea.vmem %s0, %s427
      %p429 = pneg %p46
      %p430 = pneg %p43
      %p431 = scmp.lt.s32.totalorder %s25, 1
      %s432 = scalar_select %p431, %s25, 1
      %s433 = scalar_lea.vmem %s1, %s432
      %p434 = pneg %p72
      %p435 = pneg %p69
      %p436 = pneg %p93
      %p437 = pneg %p90
      %p438 = pneg %p114
      %p439 = pneg %p111
      %p440 = pneg %p135
      %p441 = pneg %p132
      %p442 = pneg %p156
      %p443 = pneg %p153
      %p444 = pneg %p177
      %p445 = pneg %p174
      %p446 = pneg %p198
      %p447 = pneg %p195
      %p448 = pneg %p219
      %p449 = pneg %p216
      %p450 = pneg %p240
      %p451 = pneg %p237
      %p452 = pneg %p261
      %p453 = pneg %p258
      %p454 = pneg %p282
      %p455 = pneg %p279
      %p456 = pneg %p303
      %p457 = pneg %p300
      %p458 = pneg %p324
      %p459 = pneg %p321
      %p460 = pneg %p350
      %p461 = pneg %p347
      %p462 = scmp.lt.s32.totalorder %s25, 1
      %s463 = scalar_select %p462, %s25, 1
      %s464 = smul.addr %s463, 8
      %s465 = scalar_lea.vmem %s14, %s464
      %p466 = scmp.lt.s32.totalorder %s25, 1
      %s467 = scalar_select %p466, %s25, 1
      %s468 = smul.addr %s467, 8
      %s469 = scalar_lea.vmem %s0, %s468
      %p470 = scmp.lt.s32.totalorder %s25, 1
      %s471 = scalar_select %p470, %s25, 1
      %s472 = scalar_lea.vmem %s1, %s471
      %p473 = scmp.lt.s32.totalorder %s25, 1
      %s474 = scalar_select %p473, %s25, 1
      %s475 = smul.addr %s474, 8
      %s476 = scalar_lea.vmem %s14, %s475
      %v478 = vld [vmem:[%s469] sm:$0xff]
      %v479 = vld [vmem:[%s472] sm:$0x1]
      %v480 = vsub.f32 1.0, %v479
      %v481 = vmul.f32 %v480, -1e+09
      %v482 = vpack.c.bf16 %v478, %v478
      %v483 = vld [vmem:[%s2] sm:$0xf]
      %v484 = vld [vmem:[%s2 + $0x4] sm:$0xf]
      %v485 = vld [vmem:[%s2 + $0x8] sm:$0xf]
      %v486 = vld [vmem:[%s2 + $0xc] sm:$0xf]
      %v487 = vld [vmem:[%s3] sm:$0x1]
      %v489 = vlaneseq
      %v490 = vshrl.u32 %v489, 7
      %v491 = vsub.s32 0, %v490
      %v492 = vrot.slane %v487, %v491
      %v498 = vunpack.c.l.b16 %v483
      %v499 = vunpack.c.l.b16 %v484
      %v500 = vunpack.c.l.b16 %v485
      %v501 = vunpack.c.l.b16 %v486
      %v502 = vpack.c.b16 %v499, %v498
      %v503 = vpack.c.b16 %v501, %v500
      %vm506 = vcmask 261120
      %v508 = vsel %vm506, %v482, 0
      %510 = vmatprep.subr.bf16.mxu0 0
      %511 = vmatpush1.bf16.msra.mxu0 0
      %512 = vmatprep.subr.bf16.mxu0 0
      %513 = vmatpush1.bf16.msra.mxu0 0
      %514 = vmatprep.subr.bf16.mxu0 0
      %515 = vmatpush1.bf16.msra.mxu0 0
      %516 = vmatprep.subr.bf16.mxu0 0
      %517 = vmatpush1.bf16.msra.mxu0 0
      %518 = vmatprep.subr.bf16.mxu0 0
      %519 = vmatpush1.bf16.msra.mxu0 0
      %520 = vmatprep.subr.bf16.mxu0 0
      %521 = vmatpush1.bf16.msra.mxu0 0
      %522 = vmatprep.subr.bf16.mxu0 0
      %523 = vmatpush1.bf16.msra.mxu0 %v503
      %524 = vmatprep.subr.bf16.mxu0 0
      %525 = vmatpush1.bf16.msra.mxu0 %v502
      %526 = vmatprep.subr.bf16.mxu0 0
      %527 = vmatpush2.bf16.msra.mxu0 0
      %528 = vmatprep.subr.bf16.mxu0 0
      %529 = vmatpush2.bf16.msra.mxu0 0
      %530 = vmatprep.subr.bf16.mxu0 0
      %531 = vmatpush2.bf16.msra.mxu0 0
      %532 = vmatprep.subr.bf16.mxu0 0
      %533 = vmatpush2.bf16.msra.mxu0 0
      %534 = vmatprep.subr.bf16.mxu0 0
      %535 = vmatpush2.bf16.msra.mxu0 0
      %536 = vmatprep.subr.bf16.mxu0 0
      %537 = vmatpush2.bf16.msra.mxu0 0
      %538 = vmatprep.subr.bf16.mxu0 0
      %539 = vmatpush2.bf16.msra.mxu0 0
      %540 = vmatprep.subr.bf16.mxu0 0
      %541 = vmatpush2.bf16.msra.mxu0 0
      %542 = vmatprep.mubr.bf16.mxu0 0
      %543 = vmatmul.mubr.bf16.gmra.mxu0 %v508
      %v544 = vpop.f32.mrf.mxu0
      %v545 = vadd.f32 %v492, %v544
      %v546 = vpop.f32.mrf.mxu0
      %v547 = vpop.f32.mrf.mxu0
      %v548 = vpop.f32.mrf.mxu0
      %549 = vdwg.mxu0
      %551 = vrot.lane.b32.xlu0 %v545, 96
      %v552 = vpop.permute.xlu0 %551
      %vm553 = vcmask 130048
      %v554 = vsel %vm553, %v545, 0
      %v556 = vsel %vm553, %v552, 0
      %558 = vmatprep.subr.mxu0 0.0
      %559 = vmatpush1.xpose.msra.mxu0 0.0
      %560 = vmatprep.subr.mxu0 0.0
      %561 = vmatpush1.xpose.msra.mxu0 0.0
      %562 = vmatprep.subr.mxu0 0.0
      %563 = vmatpush1.xpose.msra.mxu0 0.0
      %564 = vmatprep.subr.mxu0 0.0
      %565 = vmatpush1.xpose.msra.mxu0 0.0
      %566 = vmatprep.subr.mxu0 0.0
      %567 = vmatpush1.xpose.msra.mxu0 0.0
      %568 = vmatprep.subr.mxu0 0.0
      %569 = vmatpush1.xpose.msra.mxu0 0.0
      %570 = vmatprep.subr.mxu0 0.0
      %571 = vmatpush1.xpose.msra.mxu0 0.0
      %572 = vmatprep.subr.mxu0 0.0
      %573 = vmatpush1.xpose.msra.mxu0 0.0
      %574 = vmatprep.subr.mxu0 0.0
      %575 = vmatpush1.xpose.msra.mxu0 0.0
      %576 = vmatprep.subr.mxu0 0.0
      %577 = vmatpush1.xpose.msra.mxu0 0.0
      %578 = vmatprep.subr.mxu0 0.0
      %579 = vmatpush1.xpose.msra.mxu0 0.0
      %580 = vmatprep.subr.mxu0 0.0
      %581 = vmatpush1.xpose.msra.mxu0 0.0
      %582 = vmatprep.subr.mxu0 0.0
      %583 = vmatpush1.xpose.msra.mxu0 0.0
      %584 = vmatprep.subr.mxu0 0.0
      %585 = vmatpush1.xpose.msra.mxu0 0.0
      %586 = vmatprep.subr.mxu0 0.0
      %587 = vmatpush1.xpose.msra.mxu0 0.0
      %588 = vmatprep.subr.mxu0 0.0
      %589 = vmatpush1.xpose.msra.mxu0 %v556
      %590 = vmatprep.subr.mxu0 0.0
      %591 = vmatpush2.xpose.msra.mxu0 0.0
      %592 = vmatprep.subr.mxu0 0.0
      %593 = vmatpush2.xpose.msra.mxu0 0.0
      %594 = vmatprep.subr.mxu0 0.0
      %595 = vmatpush2.xpose.msra.mxu0 0.0
      %596 = vmatprep.subr.mxu0 0.0
      %597 = vmatpush2.xpose.msra.mxu0 0.0
      %598 = vmatprep.subr.mxu0 0.0
      %599 = vmatpush2.xpose.msra.mxu0 0.0
      %600 = vmatprep.subr.mxu0 0.0
      %601 = vmatpush2.xpose.msra.mxu0 0.0
      %602 = vmatprep.subr.mxu0 0.0
      %603 = vmatpush2.xpose.msra.mxu0 0.0
      %604 = vmatprep.subr.mxu0 0.0
      %605 = vmatpush2.xpose.msra.mxu0 0.0
      %606 = vmatprep.subr.mxu0 0.0
      %607 = vmatpush2.xpose.msra.mxu0 0.0
      %608 = vmatprep.subr.mxu0 0.0
      %609 = vmatpush2.xpose.msra.mxu0 0.0
      %610 = vmatprep.subr.mxu0 0.0
      %611 = vmatpush2.xpose.msra.mxu0 0.0
      %612 = vmatprep.subr.mxu0 0.0
      %613 = vmatpush2.xpose.msra.mxu0 0.0
      %614 = vmatprep.subr.mxu0 0.0
      %615 = vmatpush2.xpose.msra.mxu0 0.0
      %616 = vmatprep.subr.mxu0 0.0
      %617 = vmatpush2.xpose.msra.mxu0 0.0
      %618 = vmatprep.subr.mxu0 0.0
      %619 = vmatpush2.xpose.msra.mxu0 0.0
      %620 = vmatprep.subr.mxu0 0.0
      %621 = vmatpush2.xpose.msra.mxu0 0.0
      %622 = vmatprep.mubr.f32.mxu0 0.0
      %623 = vmatmul.mubr.f32.gmra.mxu0 %v554
      %v624 = vpop.f32.mrf.mxu0
      %v625 = vadd.f32 0.0, %v624
      %v626 = vpop.f32.mrf.mxu0
      %627 = vdwg.mxu0
      %v628 = vmul.f32 %v625, 0.25
      %v630 = vlaneseq
      %v631 = vshrl.u32 %v630, 7
      %v632 = vsub.s32 0, %v631
      %v633 = vrot.slane %v481, %v632
      %v635 = vadd.f32 %v628, %v633
      %vm636 = vcmask 64512
      %v637 = vsel %vm636, %v635, -inf
      %638 = vmax.xlane.f32.xlu0 %v637
      %v639 = vpop.xlane.xlu0 %638
      %v640 = vsub.f32 %v635, %v639
      %v641 = vmul.f32 %v640, 1.442695
      %v642 = vpow.pop %v641
      %v643 = vsel %vm636, %v642, 0.0
      %644 = vadd.xlane.f32.xlu0 %v643
      %v645 = vpop.xlane.xlu0 %644
      %v646 = vrcp.pop %v645
      %v647 = vmul.f32 %v642, %v646
      %648 = vrot.lane.b32.xlu0 %v545, 64
      %v649 = vpop.permute.xlu0 %648
      %v652 = vsel %vm636, %v647, 0
      %654 = vmatprep.subr.mxu0 0.0
      %655 = vmatpush1.msra.mxu0 0.0
      %656 = vmatprep.subr.mxu0 0.0
      %657 = vmatpush1.msra.mxu0 0.0
      %658 = vmatprep.subr.mxu0 0.0
      %659 = vmatpush1.msra.mxu0 0.0
      %660 = vmatprep.subr.mxu0 0.0
      %661 = vmatpush1.msra.mxu0 0.0
      %662 = vmatprep.subr.mxu0 0.0
      %663 = vmatpush1.msra.mxu0 0.0
      %664 = vmatprep.subr.mxu0 0.0
      %665 = vmatpush1.msra.mxu0 0.0
      %666 = vmatprep.subr.mxu0 0.0
      %667 = vmatpush1.msra.mxu0 0.0
      %668 = vmatprep.subr.mxu0 0.0
      %669 = vmatpush1.msra.mxu0 0.0
      %670 = vmatprep.subr.mxu0 0.0
      %671 = vmatpush1.msra.mxu0 0.0
      %672 = vmatprep.subr.mxu0 0.0
      %673 = vmatpush1.msra.mxu0 0.0
      %674 = vmatprep.subr.mxu0 0.0
      %675 = vmatpush1.msra.mxu0 0.0
      %676 = vmatprep.subr.mxu0 0.0
      %677 = vmatpush1.msra.mxu0 0.0
      %678 = vmatprep.subr.mxu0 0.0
      %679 = vmatpush1.msra.mxu0 0.0
      %680 = vmatprep.subr.mxu0 0.0
      %681 = vmatpush1.msra.mxu0 0.0
      %682 = vmatprep.subr.mxu0 0.0
      %683 = vmatpush1.msra.mxu0 0.0
      %684 = vmatprep.subr.mxu0 0.0
      %685 = vmatpush1.msra.mxu0 %v649
      %686 = vmatprep.subr.mxu0 0.0
      %687 = vmatpush2.msra.mxu0 0.0
      %688 = vmatprep.subr.mxu0 0.0
      %689 = vmatpush2.msra.mxu0 0.0
      %690 = vmatprep.subr.mxu0 0.0
      %691 = vmatpush2.msra.mxu0 0.0
      %692 = vmatprep.subr.mxu0 0.0
      %693 = vmatpush2.msra.mxu0 0.0
      %694 = vmatprep.subr.mxu0 0.0
      %695 = vmatpush2.msra.mxu0 0.0
      %696 = vmatprep.subr.mxu0 0.0
      %697 = vmatpush2.msra.mxu0 0.0
      %698 = vmatprep.subr.mxu0 0.0
      %699 = vmatpush2.msra.mxu0 0.0
      %700 = vmatprep.subr.mxu0 0.0
      %701 = vmatpush2.msra.mxu0 0.0
      %702 = vmatprep.subr.mxu0 0.0
      %703 = vmatpush2.msra.mxu0 0.0
      %704 = vmatprep.subr.mxu0 0.0
      %705 = vmatpush2.msra.mxu0 0.0
      %706 = vmatprep.subr.mxu0 0.0
      %707 = vmatpush2.msra.mxu0 0.0
      %708 = vmatprep.subr.mxu0 0.0
      %709 = vmatpush2.msra.mxu0 0.0
      %710 = vmatprep.subr.mxu0 0.0
      %711 = vmatpush2.msra.mxu0 0.0
      %712 = vmatprep.subr.mxu0 0.0
      %713 = vmatpush2.msra.mxu0 0.0
      %714 = vmatprep.subr.mxu0 0.0
      %715 = vmatpush2.msra.mxu0 0.0
      %716 = vmatprep.subr.mxu0 0.0
      %717 = vmatpush2.msra.mxu0 0.0
      %718 = vmatprep.mubr.f32.mxu0 0.0
      %719 = vmatmul.mubr.f32.gmra.mxu0 %v652
      %v720 = vpop.f32.mrf.mxu0
      %v721 = vadd.f32 0.0, %v720
      %v722 = vpop.f32.mrf.mxu0
      %723 = vdwg.mxu0
      %v724 = vpack.c.bf16 %v721, %v721
      %v725 = vld [vmem:[%s4] sm:$0xf]
      %v726 = vld [vmem:[%s4 + $0x4] sm:$0xf]
      %727 = vrot.lane.b32.xlu0 %v545, 112
      %v728 = vpop.permute.xlu0 %727
      %729 = vrot.lane.b32.xlu0 %v545, 80
      %v730 = vpop.permute.xlu0 %729
      %v731 = vsel %vm553, %v728, 0
      %v733 = vsel %vm553, %v730, 0
      %735 = vmatprep.subr.mxu0 0.0
      %736 = vmatpush1.xpose.msra.mxu0 0.0
      %737 = vmatprep.subr.mxu0 0.0
      %738 = vmatpush1.xpose.msra.mxu0 0.0
      %739 = vmatprep.subr.mxu0 0.0
      %740 = vmatpush1.xpose.msra.mxu0 0.0
      %741 = vmatprep.subr.mxu0 0.0
      %742 = vmatpush1.xpose.msra.mxu0 0.0
      %743 = vmatprep.subr.mxu0 0.0
      %744 = vmatpush1.xpose.msra.mxu0 0.0
      %745 = vmatprep.subr.mxu0 0.0
      %746 = vmatpush1.xpose.msra.mxu0 0.0
      %747 = vmatprep.subr.mxu0 0.0
      %748 = vmatpush1.xpose.msra.mxu0 0.0
      %749 = vmatprep.subr.mxu0 0.0
      %750 = vmatpush1.xpose.msra.mxu0 0.0
      %751 = vmatprep.subr.mxu0 0.0
      %752 = vmatpush1.xpose.msra.mxu0 0.0
      %753 = vmatprep.subr.mxu0 0.0
      %754 = vmatpush1.xpose.msra.mxu0 0.0
      %755 = vmatprep.subr.mxu0 0.0
      %756 = vmatpush1.xpose.msra.mxu0 0.0
      %757 = vmatprep.subr.mxu0 0.0
      %758 = vmatpush1.xpose.msra.mxu0 0.0
      %759 = vmatprep.subr.mxu0 0.0
      %760 = vmatpush1.xpose.msra.mxu0 0.0
      %761 = vmatprep.subr.mxu0 0.0
      %762 = vmatpush1.xpose.msra.mxu0 0.0
      %763 = vmatprep.subr.mxu0 0.0
      %764 = vmatpush1.xpose.msra.mxu0 0.0
      %765 = vmatprep.subr.mxu0 0.0
      %766 = vmatpush1.xpose.msra.mxu0 %v733
      %767 = vmatprep.subr.mxu0 0.0
      %768 = vmatpush2.xpose.msra.mxu0 0.0
      %769 = vmatprep.subr.mxu0 0.0
      %770 = vmatpush2.xpose.msra.mxu0 0.0
      %771 = vmatprep.subr.mxu0 0.0
      %772 = vmatpush2.xpose.msra.mxu0 0.0
      %773 = vmatprep.subr.mxu0 0.0
      %774 = vmatpush2.xpose.msra.mxu0 0.0
      %775 = vmatprep.subr.mxu0 0.0
      %776 = vmatpush2.xpose.msra.mxu0 0.0
      %777 = vmatprep.subr.mxu0 0.0
      %778 = vmatpush2.xpose.msra.mxu0 0.0
      %779 = vmatprep.subr.mxu0 0.0
      %780 = vmatpush2.xpose.msra.mxu0 0.0
      %781 = vmatprep.subr.mxu0 0.0
      %782 = vmatpush2.xpose.msra.mxu0 0.0
      %783 = vmatprep.subr.mxu0 0.0
      %784 = vmatpush2.xpose.msra.mxu0 0.0
      %785 = vmatprep.subr.mxu0 0.0
      %786 = vmatpush2.xpose.msra.mxu0 0.0
      %787 = vmatprep.subr.mxu0 0.0
      %788 = vmatpush2.xpose.msra.mxu0 0.0
      %789 = vmatprep.subr.mxu0 0.0
      %790 = vmatpush2.xpose.msra.mxu0 0.0
      %791 = vmatprep.subr.mxu0 0.0
      %792 = vmatpush2.xpose.msra.mxu0 0.0
      %793 = vmatprep.subr.mxu0 0.0
      %794 = vmatpush2.xpose.msra.mxu0 0.0
      %795 = vmatprep.subr.mxu0 0.0
      %796 = vmatpush2.xpose.msra.mxu0 0.0
      %797 = vmatprep.subr.mxu0 0.0
      %798 = vmatpush2.xpose.msra.mxu0 0.0
      %799 = vmatprep.mubr.f32.mxu0 0.0
      %800 = vmatmul.mubr.f32.gmra.mxu0 %v731
      %v801 = vpop.f32.mrf.mxu0
      %v802 = vadd.f32 0.0, %v801
      %v803 = vpop.f32.mrf.mxu0
      %804 = vdwg.mxu0
      %v805 = vmul.f32 %v802, 0.25
      %v806 = vadd.f32 %v805, %v633
      %v807 = vsel %vm636, %v806, -inf
      %808 = vmax.xlane.f32.xlu0 %v807
      %v809 = vpop.xlane.xlu0 %808
      %v810 = vsub.f32 %v806, %v809
      %v811 = vmul.f32 %v810, 1.442695
      %v812 = vpow.pop %v811
      %v813 = vsel %vm636, %v812, 0.0
      %814 = vadd.xlane.f32.xlu0 %v813
      %v815 = vpop.xlane.xlu0 %814
      %v816 = vrcp.pop %v815
      %v817 = vmul.f32 %v812, %v816
      %818 = vrot.lane.b32.xlu0 %v545, 48
      %v819 = vpop.permute.xlu0 %818
      %v822 = vsel %vm636, %v817, 0
      %824 = vmatprep.subr.mxu0 0.0
      %825 = vmatpush1.msra.mxu0 0.0
      %826 = vmatprep.subr.mxu0 0.0
      %827 = vmatpush1.msra.mxu0 0.0
      %828 = vmatprep.subr.mxu0 0.0
      %829 = vmatpush1.msra.mxu0 0.0
      %830 = vmatprep.subr.mxu0 0.0
      %831 = vmatpush1.msra.mxu0 0.0
      %832 = vmatprep.subr.mxu0 0.0
      %833 = vmatpush1.msra.mxu0 0.0
      %834 = vmatprep.subr.mxu0 0.0
      %835 = vmatpush1.msra.mxu0 0.0
      %836 = vmatprep.subr.mxu0 0.0
      %837 = vmatpush1.msra.mxu0 0.0
      %838 = vmatprep.subr.mxu0 0.0
      %839 = vmatpush1.msra.mxu0 0.0
      %840 = vmatprep.subr.mxu0 0.0
      %841 = vmatpush1.msra.mxu0 0.0
      %842 = vmatprep.subr.mxu0 0.0
      %843 = vmatpush1.msra.mxu0 0.0
      %844 = vmatprep.subr.mxu0 0.0
      %845 = vmatpush1.msra.mxu0 0.0
      %846 = vmatprep.subr.mxu0 0.0
      %847 = vmatpush1.msra.mxu0 0.0
      %848 = vmatprep.subr.mxu0 0.0
      %849 = vmatpush1.msra.mxu0 0.0
      %850 = vmatprep.subr.mxu0 0.0
      %851 = vmatpush1.msra.mxu0 0.0
      %852 = vmatprep.subr.mxu0 0.0
      %853 = vmatpush1.msra.mxu0 0.0
      %854 = vmatprep.subr.mxu0 0.0
      %855 = vmatpush1.msra.mxu0 %v819
      %856 = vmatprep.subr.mxu0 0.0
      %857 = vmatpush2.msra.mxu0 0.0
      %858 = vmatprep.subr.mxu0 0.0
      %859 = vmatpush2.msra.mxu0 0.0
      %860 = vmatprep.subr.mxu0 0.0
      %861 = vmatpush2.msra.mxu0 0.0
      %862 = vmatprep.subr.mxu0 0.0
      %863 = vmatpush2.msra.mxu0 0.0
      %864 = vmatprep.subr.mxu0 0.0
      %865 = vmatpush2.msra.mxu0 0.0
      %866 = vmatprep.subr.mxu0 0.0
      %867 = vmatpush2.msra.mxu0 0.0
      %868 = vmatprep.subr.mxu0 0.0
      %869 = vmatpush2.msra.mxu0 0.0
      %870 = vmatprep.subr.mxu0 0.0
      %871 = vmatpush2.msra.mxu0 0.0
      %872 = vmatprep.subr.mxu0 0.0
      %873 = vmatpush2.msra.mxu0 0.0
      %874 = vmatprep.subr.mxu0 0.0
      %875 = vmatpush2.msra.mxu0 0.0
      %876 = vmatprep.subr.mxu0 0.0
      %877 = vmatpush2.msra.mxu0 0.0
      %878 = vmatprep.subr.mxu0 0.0
      %879 = vmatpush2.msra.mxu0 0.0
      %880 = vmatprep.subr.mxu0 0.0
      %881 = vmatpush2.msra.mxu0 0.0
      %882 = vmatprep.subr.mxu0 0.0
      %883 = vmatpush2.msra.mxu0 0.0
      %884 = vmatprep.subr.mxu0 0.0
      %885 = vmatpush2.msra.mxu0 0.0
      %886 = vmatprep.subr.mxu0 0.0
      %887 = vmatpush2.msra.mxu0 0.0
      %888 = vmatprep.mubr.f32.mxu0 0.0
      %889 = vmatmul.mubr.f32.gmra.mxu0 %v822
      %v890 = vpop.f32.mrf.mxu0
      %v891 = vadd.f32 0.0, %v890
      %v892 = vpop.f32.mrf.mxu0
      %893 = vdwg.mxu0
      %v894 = vpack.c.bf16 %v891, %v891
      %v895 = vld [vmem:[%s4 + $0x8] sm:$0xf]
      %v896 = vld [vmem:[%s4 + $0xc] sm:$0xf]
      %v899 = vunpack.c.l.b16 %v895
      %v900 = vunpack.c.l.b16 %v896
      %v901 = vpack.c.b16 %v900, %v899
      %v904 = vsel %vm553, %v894, 0
      %906 = vmatprep.subr.bf16.mxu0 0
      %907 = vmatpush1.bf16.msra.mxu0 0
      %908 = vmatprep.subr.bf16.mxu0 0
      %909 = vmatpush1.bf16.msra.mxu0 0
      %910 = vmatprep.subr.bf16.mxu0 0
      %911 = vmatpush1.bf16.msra.mxu0 0
      %912 = vmatprep.subr.bf16.mxu0 0
      %913 = vmatpush1.bf16.msra.mxu0 0
      %914 = vmatprep.subr.bf16.mxu0 0
      %915 = vmatpush1.bf16.msra.mxu0 0
      %916 = vmatprep.subr.bf16.mxu0 0
      %917 = vmatpush1.bf16.msra.mxu0 0
      %918 = vmatprep.subr.bf16.mxu0 0
      %919 = vmatpush1.bf16.msra.mxu0 0
      %920 = vmatprep.subr.bf16.mxu0 0
      %921 = vmatpush1.bf16.msra.mxu0 %v901
      %922 = vmatprep.subr.bf16.mxu0 0
      %923 = vmatpush2.bf16.msra.mxu0 0
      %924 = vmatprep.subr.bf16.mxu0 0
      %925 = vmatpush2.bf16.msra.mxu0 0
      %926 = vmatprep.subr.bf16.mxu0 0
      %927 = vmatpush2.bf16.msra.mxu0 0
      %928 = vmatprep.subr.bf16.mxu0 0
      %929 = vmatpush2.bf16.msra.mxu0 0
      %930 = vmatprep.subr.bf16.mxu0 0
      %931 = vmatpush2.bf16.msra.mxu0 0
      %932 = vmatprep.subr.bf16.mxu0 0
      %933 = vmatpush2.bf16.msra.mxu0 0
      %934 = vmatprep.subr.bf16.mxu0 0
      %935 = vmatpush2.bf16.msra.mxu0 0
      %936 = vmatprep.subr.bf16.mxu0 0
      %937 = vmatpush2.bf16.msra.mxu0 0
      %938 = vmatprep.mubr.bf16.mxu0 0
      %939 = vmatmul.mubr.bf16.gmra.mxu0 %v904
      %v940 = vpop.f32.mrf.mxu0
      %v941 = vadd.f32 0.0, %v940
      %v942 = vpop.f32.mrf.mxu0
      %v943 = vpop.f32.mrf.mxu0
      %v944 = vpop.f32.mrf.mxu0
      %945 = vdwg.mxu0
      %v948 = vunpack.c.l.b16 %v725
      %v949 = vunpack.c.l.b16 %v726
      %v950 = vpack.c.b16 %v949, %v948
      %v953 = vsel %vm553, %v724, 0
      %955 = vmatprep.subr.bf16.mxu0 0
      %956 = vmatpush1.bf16.msra.mxu0 0
      %957 = vmatprep.subr.bf16.mxu0 0
      %958 = vmatpush1.bf16.msra.mxu0 0
      %959 = vmatprep.subr.bf16.mxu0 0
      %960 = vmatpush1.bf16.msra.mxu0 0
      %961 = vmatprep.subr.bf16.mxu0 0
      %962 = vmatpush1.bf16.msra.mxu0 0
      %963 = vmatprep.subr.bf16.mxu0 0
      %964 = vmatpush1.bf16.msra.mxu0 0
      %965 = vmatprep.subr.bf16.mxu0 0
      %966 = vmatpush1.bf16.msra.mxu0 0
      %967 = vmatprep.subr.bf16.mxu0 0
      %968 = vmatpush1.bf16.msra.mxu0 0
      %969 = vmatprep.subr.bf16.mxu0 0
      %970 = vmatpush1.bf16.msra.mxu0 %v950
      %971 = vmatprep.subr.bf16.mxu0 0
      %972 = vmatpush2.bf16.msra.mxu0 0
      %973 = vmatprep.subr.bf16.mxu0 0
      %974 = vmatpush2.bf16.msra.mxu0 0
      %975 = vmatprep.subr.bf16.mxu0 0
      %976 = vmatpush2.bf16.msra.mxu0 0
      %977 = vmatprep.subr.bf16.mxu0 0
      %978 = vmatpush2.bf16.msra.mxu0 0
      %979 = vmatprep.subr.bf16.mxu0 0
      %980 = vmatpush2.bf16.msra.mxu0 0
      %981 = vmatprep.subr.bf16.mxu0 0
      %982 = vmatpush2.bf16.msra.mxu0 0
      %983 = vmatprep.subr.bf16.mxu0 0
      %984 = vmatpush2.bf16.msra.mxu0 0
      %985 = vmatprep.subr.bf16.mxu0 0
      %986 = vmatpush2.bf16.msra.mxu0 0
      %987 = vmatprep.mubr.bf16.mxu0 0
      %988 = vmatmul.mubr.bf16.gmra.mxu0 %v953
      %v989 = vpop.f32.mrf.mxu0
      %v990 = vadd.f32 %v941, %v989
      %v991 = vpop.f32.mrf.mxu0
      %v992 = vpop.f32.mrf.mxu0
      %v993 = vpop.f32.mrf.mxu0
      %994 = vdwg.mxu0
      %v995 = vld [vmem:[%s5] sm:$0x1]
      %v997 = vlaneseq
      %v998 = vshrl.u32 %v997, 7
      %v999 = vsub.s32 0, %v998
      %v1000 = vrot.slane %v995, %v999
      %v1002 = vadd.f32 %v990, %v1000
      %v1003 = vadd.f32 %v1002, %v478
      %v1004 = vld [vmem:[%s6] sm:$0x1]
      %v1005 = vld [vmem:[%s7] sm:$0x1]
      %v1006 = vsel %vm506, %v1003, 0.0
      %1007 = vadd.xlane.f32.xlu0 %v1006
      %v1008 = vpop.xlane.xlu0 %1007
      %v1009 = vrcp.pop 32.0
      %v1010 = vmul.f32 %v1008, %v1009
      %v1011 = vsub.f32 %v1003, %v1010
      %v1012 = vmul.f32 %v1011, %v1011
      %v1013 = vsel %vm506, %v1012, 0.0
      %1014 = vadd.xlane.f32.xlu0 %v1013
      %v1015 = vpop.xlane.xlu0 %1014
      %v1016 = vmul.f32 %v1015, %v1009
      %v1017 = vadd.f32 %v1016, 1e-12
      %v1018 = vrsqrt.pop %v1017
      %v1019 = vmul.f32 %v1011, %v1018
      %v1021 = vlaneseq
      %v1022 = vshrl.u32 %v1021, 7
      %v1023 = vsub.s32 0, %v1022
      %v1024 = vrot.slane %v1004, %v1023
      %v1026 = vmul.f32 %v1019, %v1024
      %v1028 = vlaneseq
      %v1029 = vshrl.u32 %v1028, 7
      %v1030 = vsub.s32 0, %v1029
      %v1031 = vrot.slane %v1005, %v1030
      %v1033 = vadd.f32 %v1026, %v1031
      %v1034 = vpack.c.bf16 %v1033, %v1033
      %v1035 = vld [vmem:[%s8] sm:$0xf]
      %v1036 = vld [vmem:[%s8 + $0x4] sm:$0xf]
      %v1037 = vld [vmem:[%s8 + $0x8] sm:$0xf]
      %v1038 = vld [vmem:[%s8 + $0xc] sm:$0xf]
      %v1039 = vld [vmem:[%s9] sm:$0x1]
      %v1041 = vlaneseq
      %v1042 = vshrl.u32 %v1041, 7
      %v1043 = vsub.s32 0, %v1042
      %v1044 = vrot.slane %v1039, %v1043
      %v1050 = vunpack.c.l.b16 %v1035
      %v1051 = vunpack.c.l.b16 %v1036
      %v1052 = vunpack.c.l.b16 %v1037
      %v1053 = vunpack.c.l.b16 %v1038
      %v1054 = vpack.c.b16 %v1051, %v1050
      %v1055 = vpack.c.b16 %v1053, %v1052
      %v1059 = vsel %vm506, %v1034, 0
      %1061 = vmatprep.subr.bf16.mxu0 0
      %1062 = vmatpush1.bf16.msra.mxu0 0
      %1063 = vmatprep.subr.bf16.mxu0 0
      %1064 = vmatpush1.bf16.msra.mxu0 0
      %1065 = vmatprep.subr.bf16.mxu0 0
      %1066 = vmatpush1.bf16.msra.mxu0 0
      %1067 = vmatprep.subr.bf16.mxu0 0
      %1068 = vmatpush1.bf16.msra.mxu0 0
      %1069 = vmatprep.subr.bf16.mxu0 0
      %1070 = vmatpush1.bf16.msra.mxu0 0
      %1071 = vmatprep.subr.bf16.mxu0 0
      %1072 = vmatpush1.bf16.msra.mxu0 0
      %1073 = vmatprep.subr.bf16.mxu0 0
      %1074 = vmatpush1.bf16.msra.mxu0 %v1055
      %1075 = vmatprep.subr.bf16.mxu0 0
      %1076 = vmatpush1.bf16.msra.mxu0 %v1054
      %1077 = vmatprep.subr.bf16.mxu0 0
      %1078 = vmatpush2.bf16.msra.mxu0 0
      %1079 = vmatprep.subr.bf16.mxu0 0
      %1080 = vmatpush2.bf16.msra.mxu0 0
      %1081 = vmatprep.subr.bf16.mxu0 0
      %1082 = vmatpush2.bf16.msra.mxu0 0
      %1083 = vmatprep.subr.bf16.mxu0 0
      %1084 = vmatpush2.bf16.msra.mxu0 0
      %1085 = vmatprep.subr.bf16.mxu0 0
      %1086 = vmatpush2.bf16.msra.mxu0 0
      %1087 = vmatprep.subr.bf16.mxu0 0
      %1088 = vmatpush2.bf16.msra.mxu0 0
      %1089 = vmatprep.subr.bf16.mxu0 0
      %1090 = vmatpush2.bf16.msra.mxu0 0
      %1091 = vmatprep.subr.bf16.mxu0 0
      %1092 = vmatpush2.bf16.msra.mxu0 0
      %1093 = vmatprep.mubr.bf16.mxu0 0
      %1094 = vmatmul.mubr.bf16.gmra.mxu0 %v1059
      %v1095 = vpop.f32.mrf.mxu0
      %v1096 = vadd.f32 %v1044, %v1095
      %v1097 = vpop.f32.mrf.mxu0
      %v1098 = vpop.f32.mrf.mxu0
      %v1099 = vpop.f32.mrf.mxu0
      %1100 = vdwg.mxu0
      %v1101 = vmul.f32 %v1096, 0.5
      %v1102 = vmul.f32 %v1096, 0.044715
      %v1103 = vmul.f32 %v1102, %v1096
      %v1104 = vmul.f32 %v1103, %v1096
      %v1105 = vadd.f32 %v1096, %v1104
      %v1106 = vmul.f32 %v1105, 0.7978846
      %v1107 = vtanh.pop %v1106
      %v1108 = vadd.f32 %v1107, 1.0
      %v1109 = vmul.f32 %v1101, %v1108
      %v1110 = vpack.c.bf16 %v1109, %v1109
      %v1111 = vld [vmem:[%s10] sm:$0xf]
      %v1112 = vld [vmem:[%s10 + $0x4] sm:$0xf]
      %v1113 = vld [vmem:[%s10 + $0x8] sm:$0xf]
      %v1114 = vld [vmem:[%s10 + $0xc] sm:$0xf]
      %v1115 = vld [vmem:[%s10 + $0x10] sm:$0xf]
      %v1116 = vld [vmem:[%s10 + $0x14] sm:$0xf]
      %v1117 = vld [vmem:[%s10 + $0x18] sm:$0xf]
      %v1118 = vld [vmem:[%s10 + $0x1c] sm:$0xf]
      %v1119 = vld [vmem:[%s11] sm:$0x1]
      %v1121 = vlaneseq
      %v1122 = vshrl.u32 %v1121, 7
      %v1123 = vsub.s32 0, %v1122
      %v1124 = vrot.slane %v1119, %v1123
      %v1134 = vunpack.c.l.b16 %v1111
      %v1135 = vunpack.c.l.b16 %v1112
      %v1136 = vunpack.c.l.b16 %v1113
      %v1137 = vunpack.c.l.b16 %v1114
      %v1138 = vunpack.c.l.b16 %v1115
      %v1139 = vunpack.c.l.b16 %v1116
      %v1140 = vunpack.c.l.b16 %v1117
      %v1141 = vunpack.c.l.b16 %v1118
      %v1142 = vpack.c.b16 %v1135, %v1134
      %v1143 = vpack.c.b16 %v1137, %v1136
      %v1144 = vpack.c.b16 %v1139, %v1138
      %v1145 = vpack.c.b16 %v1141, %v1140
      %vm1150 = vcmask 523264
      %v1152 = vsel %vm1150, %v1110, 0
      %1154 = vmatprep.subr.bf16.mxu0 0
      %1155 = vmatpush1.bf16.msra.mxu0 0
      %1156 = vmatprep.subr.bf16.mxu0 0
      %1157 = vmatpush1.bf16.msra.mxu0 0
      %1158 = vmatprep.subr.bf16.mxu0 0
      %1159 = vmatpush1.bf16.msra.mxu0 0
      %1160 = vmatprep.subr.bf16.mxu0 0
      %1161 = vmatpush1.bf16.msra.mxu0 0
      %1162 = vmatprep.subr.bf16.mxu0 0
      %1163 = vmatpush1.bf16.msra.mxu0 %v1145
      %1164 = vmatprep.subr.bf16.mxu0 0
      %1165 = vmatpush1.bf16.msra.mxu0 %v1144
      %1166 = vmatprep.subr.bf16.mxu0 0
      %1167 = vmatpush1.bf16.msra.mxu0 %v1143
      %1168 = vmatprep.subr.bf16.mxu0 0
      %1169 = vmatpush1.bf16.msra.mxu0 %v1142
      %1170 = vmatprep.subr.bf16.mxu0 0
      %1171 = vmatpush2.bf16.msra.mxu0 0
      %1172 = vmatprep.subr.bf16.mxu0 0
      %1173 = vmatpush2.bf16.msra.mxu0 0
      %1174 = vmatprep.subr.bf16.mxu0 0
      %1175 = vmatpush2.bf16.msra.mxu0 0
      %1176 = vmatprep.subr.bf16.mxu0 0
      %1177 = vmatpush2.bf16.msra.mxu0 0
      %1178 = vmatprep.subr.bf16.mxu0 0
      %1179 = vmatpush2.bf16.msra.mxu0 0
      %1180 = vmatprep.subr.bf16.mxu0 0
      %1181 = vmatpush2.bf16.msra.mxu0 0
      %1182 = vmatprep.subr.bf16.mxu0 0
      %1183 = vmatpush2.bf16.msra.mxu0 0
      %1184 = vmatprep.subr.bf16.mxu0 0
      %1185 = vmatpush2.bf16.msra.mxu0 0
      %1186 = vmatprep.mubr.bf16.mxu0 0
      %1187 = vmatmul.mubr.bf16.gmra.mxu0 %v1152
      %v1188 = vpop.f32.mrf.mxu0
      %v1189 = vadd.f32 %v1124, %v1188
      %v1190 = vpop.f32.mrf.mxu0
      %v1191 = vpop.f32.mrf.mxu0
      %v1192 = vpop.f32.mrf.mxu0
      %1193 = vdwg.mxu0
      %v1194 = vadd.f32 %v1189, %v1033
      %v1195 = vld [vmem:[%s12] sm:$0x1]
      %v1196 = vld [vmem:[%s13] sm:$0x1]
      %v1197 = vsel %vm506, %v1194, 0.0
      %1198 = vadd.xlane.f32.xlu0 %v1197
      %v1199 = vpop.xlane.xlu0 %1198
      %v1200 = vmul.f32 %v1199, %v1009
      %v1201 = vsub.f32 %v1194, %v1200
      %v1202 = vmul.f32 %v1201, %v1201
      %v1203 = vsel %vm506, %v1202, 0.0
      %1204 = vadd.xlane.f32.xlu0 %v1203
      %v1205 = vpop.xlane.xlu0 %1204
      %v1206 = vmul.f32 %v1205, %v1009
      %v1207 = vadd.f32 %v1206, 1e-12
      %v1208 = vrsqrt.pop %v1207
      %v1209 = vmul.f32 %v1201, %v1208
      %v1211 = vlaneseq
      %v1212 = vshrl.u32 %v1211, 7
      %v1213 = vsub.s32 0, %v1212
      %v1214 = vrot.slane %v1195, %v1213
      %v1216 = vmul.f32 %v1209, %v1214
      %v1218 = vlaneseq
      %v1219 = vshrl.u32 %v1218, 7
      %v1220 = vsub.s32 0, %v1219
      %v1221 = vrot.slane %v1196, %v1220
      %v1223 = vadd.f32 %v1216, %v1221
      %1224 = vst.msk [vmem:[%s476] sm:$0xff] %vm506, %v1223
      %p1225 = scmp.lt.s32.totalorder %s25, 1
      %s1226 = scalar_select %p1225, %s25, 1
      %s1227 = smul.addr %s1226, 8
      %s1228 = scalar_lea.vmem %s14, %s1227
      // Predicated region
      $region77: #{counseling_ai_forward.5} parent=75 // pred_check
        %p1229 = pneg %p347
      $region78: #{counseling_ai_forward.5} parent=75 // pred_check_branch
        %1231 = sbr.rel (%p1229) target = $region80
      $region79: #{counseling_ai_forward.5} parent=75 // pred_region
        _
      $region80: #{counseling_ai_forward.5} parent=75 // pred_fallthru
        _
    $region76: #{counseling_ai_forward.5} parent=5 // pred_fallthru
      _
    %p1232 = scmp.le.s32.totalorder 2, %s20
    // Predicated region
    $region81: #{counseling_ai_forward.5} parent=5 // pred_check
      %p1233 = pneg %p1232
    $region82: #{counseling_ai_forward.5} parent=5 // pred_check_branch
      %1235 = sbr.rel (%p1233) target = $region84
    $region83: #{counseling_ai_forward.5} parent=5 // pred_region
      %s1236 = ssub.s32 %s20, 2
      // Predicated region
      $region85: #{counseling_ai_forward.5} parent=83 // pred_check
        %p1237 = pneg %p353
      $region86: #{counseling_ai_forward.5} parent=83 // pred_check_branch
        %1239 = sbr.rel (%p1237) target = $region88
      $region87: #{counseling_ai_forward.5} parent=83 // pred_region
        %p1240 = scmp.lt.s32.totalorder %s26, 1
        %s1241 = scalar_select %p1240, %s26, 1
        %s1242 = smul.addr %s1241, 8
        %s1243 = scalar_lea.vmem %s14, %s1242
      $region88: #{counseling_ai_forward.5} parent=83 // pred_fallthru
        _
    $region84: #{counseling_ai_forward.5} parent=5 // pred_fallthru
      _
  $region6: #{counseling_ai_forward.5} parent=0 // loop_footer
    %s24 = sadd.s32 1, %s20
  $region7: #{counseling_ai_forward.5} parent=0 // loop_footer_branch
    %19 = sbr.rel target = $region3
  $region8: #{counseling_ai_forward.5} parent=0 // loop_exit
    _

// kernel: counseling_ai_forward.7
$region0: #{counseling_ai_forward.7}
  #allocation0 [shape = 'u32[]', space=smem, size = 0x4, offset = 0x4, fixed_abs, tag = 'smem constant byte address 0x4 - core index']
  #allocation1 [shape = 'u32[144,128]{1,0:T(1,128)}', space=vmem, size = 0x12000, scoped, tag = 'internal scratch']
  %s0 = inlined_call_operand.vmem [shape: f32[2,8,32], index: 0, kind: input, shape index: {}]
  %s1 = inlined_call_operand.vmem [shape: bf16[32,64], index: 1, kind: input, shape index: {}]
  %s2 = inlined_call_operand.vmem [shape: f32[1,64], index: 2, kind: input, shape index: {}]
  %s3 = inlined_call_operand.vmem [shape: s32[2,8,1], index: 3, kind: input, shape index: {}]
  %s4 = inlined_call_operand.hbm [shape: f32[2,8,64], index: 4, kind: output, shape index: {0}]
  %s5 = inlined_call_operand.vmem [shape: f32[2,1,1], index: 5, kind: output, shape index: {1}]
  %s6 = inlined_call_operand.vmem [shape: f32[2,1,1], index: 6, kind: output, shape index: {2}]
  %7 = xla_tuple %s4, %s5, %s6
  %s8 = sld [smem:[#allocation0]]
  $region65: #{counseling_ai_forward.7} parent=0
    _
  %s10 = ssub.s32 1, %s8
  %s11 = scalar_select 0, %s10, %s8
  $region1: #{counseling_ai_forward.7} parent=0
    #allocation2 [shape = 'u8[8192]{0}', space=vmem, size = 0x2000, scoped, tag = 'output window, operand 0']
    #allocation3 [shape = 's32[2]{0}', space=sflag, size = 0x8, scoped, tag = 'scoped memory for counseling_ai_forward.7']
    %12 = vsyncpa [#allocation3], 0
    %s13 = scalar_lea.sflag [#allocation3], 1
    %14 = vsyncpa %s13, 0
    loop: start=0, step=1, limit=4
    $region2: #{counseling_ai_forward.7} parent=1 // loop_pre_header
      _
    $region3: #{counseling_ai_forward.7} parent=1 // loop_header
      %s16 = sphi 0, %s20
      %p17 = scmp.ge.s32.totalorder %s16, 4
      %s26 = sphi 0, %s28
      %s29 = sphi 0, %s26
      %s30 = sphi 0, %s29
      %s46 = sphi 0, %s30
      %s50 = sphi 0, %s50
      %s52 = sphi 0, %s50
      %s53 = sphi 0, %s52
      %s67 = sphi 0, %s53
      %s71 = sphi 0, %s71
      %s73 = sphi 0, %s71
      %s74 = sphi 0, %s73
      %s88 = sphi 0, %s74
      %s94 = sphi 0, %s96
      %s97 = sphi 0, %s94
      %s98 = sphi 0, %s97
      %s114 = sphi 0, %s98
      %s120 = sphi 0, %s122
      %s123 = sphi 0, %s120
      %s124 = sphi 0, %s123
      %s140 = sphi 0, %s124
      %s146 = sphi 0, %s148
      %s149 = sphi 0, %s146
      %s150 = sphi 0, %s149
      %s166 = sphi 0, %s150
      %s172 = sphi 0, %s174
      %s175 = sphi 0, %s172
      %s176 = sphi 0, %s175
      %s192 = sphi 0, %s176
    $region4: #{counseling_ai_forward.7} parent=1 // loop_header_branch
      %19 = sbr.rel (%p17) target = $region8
    $region5: #{counseling_ai_forward.7} parent=1 // loop_body
      %s21 = ssub.s32 %s16, 1
      %s22 = ssub.s32 %s16, 2
      %s23 = sadd.s32 %s16, 1
      %s24 = ssub.s32 %s16, %s23
      %p25 = scmp.eq.s32.totalorder %s24, 0
      %s27 = sadd.s32 %s26, 1
      %s28 = scalar_select %p25, %s26, %s27
      %p31 = pneg %p25
      %p32 = scmp.eq.s32.totalorder %s16, 1
      %p33 = por %p31, %p32
      %p34 = scmp.ne.s32.totalorder %s26, %s29
      %p35 = scmp.eq.s32.totalorder %s16, 0
      %p36 = por %p34, %p35
      %p37 = scmp.ne.s32.totalorder %s26, %s29
      %p38 = scmp.eq.s32.totalorder %s21, 1
      %p39 = por %p37, %p38
      %p40 = scmp.ne.s32.totalorder %s29, %s30
      %p41 = scmp.eq.s32.totalorder %s21, 0
      %p42 = por %p40, %p41
      %p43 = scmp.ne.s32.totalorder %s29, %s30
      %p44 = scmp.eq.s32.totalorder %s22, 1
      %p45 = por %p43, %p44
      %p47 = scmp.ne.s32.totalorder %s30, %s46
      %p48 = scmp.eq.s32.totalorder %s22, 0
      %p49 = por %p47, %p48
      %s51 = sadd.s32 %s50, 1
      %p54 = scmp.eq.s32.totalorder %s16, 1
      %p55 = scmp.ne.s32.totalorder %s50, %s52
      %p56 = scmp.eq.s32.totalorder %s16, 0
      %p57 = por %p55, %p56
      %p58 = scmp.ne.s32.totalorder %s50, %s52
      %p59 = scmp.eq.s32.totalorder %s21, 1
      %p60 = por %p58, %p59
      %p61 = scmp.ne.s32.totalorder %s52, %s53
      %p62 = scmp.eq.s32.totalorder %s21, 0
      %p63 = por %p61, %p62
      %p64 = scmp.ne.s32.totalorder %s52, %s53
      %p65 = scmp.eq.s32.totalorder %s22, 1
      %p66 = por %p64, %p65
      %p68 = scmp.ne.s32.totalorder %s53, %s67
      %p69 = scmp.eq.s32.totalorder %s22, 0
      %p70 = por %p68, %p69
      %s72 = sadd.s32 %s71, 1
      %p75 = scmp.eq.s32.totalorder %s16, 1
      %p76 = scmp.ne.s32.totalorder %s71, %s73
      %p77 = scmp.eq.s32.totalorder %s16, 0
      %p78 = por %p76, %p77
      %p79 = scmp.ne.s32.totalorder %s71, %s73
      %p80 = scmp.eq.s32.totalorder %s21, 1
      %p81 = por %p79, %p80
      %p82 = scmp.ne.s32.totalorder %s73, %s74
      %p83 = scmp.eq.s32.totalorder %s21, 0
      %p84 = por %p82, %p83
      %p85 = scmp.ne.s32.totalorder %s73, %s74
      %p86 = scmp.eq.s32.totalorder %s22, 1
      %p87 = por %p85, %p86
      %p89 = scmp.ne.s32.totalorder %s74, %s88
      %p90 = scmp.eq.s32.totalorder %s22, 0
      %p91 = por %p89, %p90
      %s92 = ssub.s32 %s16, %s23
      %p93 = scmp.eq.s32.totalorder %s92, 0
      %s95 = sadd.s32 %s94, 1
      %s96 = scalar_select %p93, %s94, %s95
      %p99 = pneg %p93
      %p100 = scmp.eq.s32.totalorder %s16, 1
      %p101 = por %p99, %p100
      %p102 = scmp.ne.s32.totalorder %s94, %s97
      %p103 = scmp.eq.s32.totalorder %s16, 0
      %p104 = por %p102, %p103
      %p105 = scmp.ne.s32.totalorder %s94, %s97
      %p106 = scmp.eq.s32.totalorder %s21, 1
      %p107 = por %p105, %p106
      %p108 = scmp.ne.s32.totalorder %s97, %s98
      %p109 = scmp.eq.s32.totalorder %s21, 0
      %p110 = por %p108, %p109
      %p111 = scmp.ne.s32.totalorder %s97, %s98
      %p112 = scmp.eq.s32.totalorder %s22, 1
      %p113 = por %p111, %p112
      %p115 = scmp.ne.s32.totalorder %s98, %s114
      %p116 = scmp.eq.s32.totalorder %s22, 0
      %p117 = por %p115, %p116
      %s118 = ssub.s32 %s16, %s23
      %p119 = scmp.eq.s32.totalorder %s118, 0
      %s121 = sadd.s32 %s120, 1
      %s122 = scalar_select %p119, %s120, %s121
      %p125 = pneg %p119
      %p126 = scmp.eq.s32.totalorder %s16, 1
      %p127 = por %p125, %p126
      %p128 = scmp.ne.s32.totalorder %s120, %s123
      %p129 = scmp.eq.s32.totalorder %s16, 0
      %p130 = por %p128, %p129
      %p131 = scmp.ne.s32.totalorder %s120, %s123
      %p132 = scmp.eq.s32.totalorder %s21, 1
      %p133 = por %p131, %p132
      %p134 = scmp.ne.s32.totalorder %s123, %s124
      %p135 = scmp.eq.s32.totalorder %s21, 0
      %p136 = por %p134, %p135
      %p137 = scmp.ne.s32.totalorder %s123, %s124
      %p138 = scmp.eq.s32.totalorder %s22, 1
      %p139 = por %p137, %p138
      %p141 = scmp.ne.s32.totalorder %s124, %s140
      %p142 = scmp.eq.s32.totalorder %s22, 0
      %p143 = por %p141, %p142
      %s144 = ssub.s32 %s16, %s23
      %p145 = scmp.eq.s32.totalorder %s144, 0
      %s147 = sadd.s32 %s146, 1
      %s148 = scalar_select %p145, %s146, %s147
      %p151 = pneg %p145
      %p152 = scmp.eq.s32.totalorder %s16, 1
      %p153 = por %p151, %p152
      %p154 = scmp.ne.s32.totalorder %s146, %s149
      %p155 = scmp.eq.s32.totalorder %s16, 0
      %p156 = por %p154, %p155
      %p157 = scmp.ne.s32.totalorder %s146, %s149
      %p158 = scmp.eq.s32.totalorder %s21, 1
      %p159 = por %p157, %p158
      %p160 = scmp.ne.s32.totalorder %s149, %s150
      %p161 = scmp.eq.s32.totalorder %s21, 0
      %p162 = por %p160, %p161
      %p163 = scmp.ne.s32.totalorder %s149, %s150
      %p164 = scmp.eq.s32.totalorder %s22, 1
      %p165 = por %p163, %p164
      %p167 = scmp.ne.s32.totalorder %s150, %s166
      %p168 = scmp.eq.s32.totalorder %s22, 0
      %p169 = por %p167, %p168
      %s170 = ssub.s32 %s16, %s23
      %p171 = scmp.eq.s32.totalorder %s170, 0
      %s173 = sadd.s32 %s172, 1
      %s174 = scalar_select %p171, %s172, %s173
      %p177 = pneg %p171
      %p178 = scmp.eq.s32.totalorder %s16, 1
      %p179 = por %p177, %p178
      %p180 = scmp.ne.s32.totalorder %s172, %s175
      %p181 = scmp.eq.s32.totalorder %s16, 0
      %p182 = por %p180, %p181
      %p183 = scmp.ne.s32.totalorder %s172, %s175
      %p184 = scmp.eq.s32.totalorder %s21, 1
      %p185 = por %p183, %p184
      %p186 = scmp.ne.s32.totalorder %s175, %s176
      %p187 = scmp.eq.s32.totalorder %s21, 0
      %p188 = por %p186, %p187
      %p189 = scmp.ne.s32.totalorder %s175, %s176
      %p190 = scmp.eq.s32.totalorder %s22, 1
      %p191 = por %p189, %p190
      %p193 = scmp.ne.s32.totalorder %s176, %s192
      %p194 = scmp.eq.s32.totalorder %s22, 0
      %p195 = por %p193, %p194
      %p196 = scmp.le.s32.totalorder 1, %s16
      %p197 = scmp.lt.s32.totalorder %s16, 3
      %p198 = pnand %p196, %p197
      %p199 = pneg %p198
      // Predicated region
      $region9: #{counseling_ai_forward.7} parent=5 // pred_check
        _
      $region10: #{counseling_ai_forward.7} parent=5 // pred_check_branch
        %201 = sbr.rel (%p198) target = $region12
      $region11: #{counseling_ai_forward.7} parent=5 // pred_region
        %s202 = ssub.s32 %s16, 1
        // Predicated region
        $region13: #{counseling_ai_forward.7} parent=11 // pred_check
          %p203 = pneg %p63
        $region14: #{counseling_ai_forward.7} parent=11 // pred_check_branch
          %205 = sbr.rel (%p203) target = $region16
        $region15: #{counseling_ai_forward.7} parent=11 // pred_region
          _
        $region16: #{counseling_ai_forward.7} parent=11 // pred_fallthru
          _
        // Predicated region
        $region17: #{counseling_ai_forward.7} parent=11 // pred_check
          %p206 = pneg %p84
        $region18: #{counseling_ai_forward.7} parent=11 // pred_check_branch
          %208 = sbr.rel (%p206) target = $region20
        $region19: #{counseling_ai_forward.7} parent=11 // pred_region
          _
        $region20: #{counseling_ai_forward.7} parent=11 // pred_fallthru
          _
      $region12: #{counseling_ai_forward.7} parent=5 // pred_fallthru
        _
      %p209 = scmp.lt.s32.totalorder %s16, 2
      // Predicated region
      $region21: #{counseling_ai_forward.7} parent=5 // pred_check
        %p210 = pneg %p209
      $region22: #{counseling_ai_forward.7} parent=5 // pred_check_branch
        %212 = sbr.rel (%p210) target = $region24
      $region23: #{counseling_ai_forward.7} parent=5 // pred_region
        // Predicated region
        $region25: #{counseling_ai_forward.7} parent=23 // pred_check
          %p213 = pneg %p36
        $region26: #{counseling_ai_forward.7} parent=23 // pred_check_branch
          %215 = sbr.rel (%p213) target = $region28
        $region27: #{counseling_ai_forward.7} parent=23 // pred_region
          %p216 = scmp.lt.s32.totalorder %s16, 1
          %s217 = scalar_select %p216, %s16, 1
          %s218 = smul.addr %s217, 8
          %s219 = scalar_lea.vmem %s0, %s218
        $region28: #{counseling_ai_forward.7} parent=23 // pred_fallthru
          _
        // Predicated region
        $region29: #{counseling_ai_forward.7} parent=23 // pred_check
          %p220 = pneg %p104
        $region30: #{counseling_ai_forward.7} parent=23 // pred_check_branch
          %222 = sbr.rel (%p220) target = $region32
        $region31: #{counseling_ai_forward.7} parent=23 // pred_region
          %p223 = scmp.lt.s32.totalorder %s16, 1
          %s224 = scalar_select %p223, %s16, 1
          %s225 = smul.addr %s224, 8
          %s226 = scalar_lea.vmem %s3, %s225
        $region32: #{counseling_ai_forward.7} parent=23 // pred_fallthru
          _
      $region24: #{counseling_ai_forward.7} parent=5 // pred_fallthru
        _
      %p227 = scmp.le.s32.totalorder 1, %s16
      %p228 = scmp.lt.s32.totalorder %s16, 3
      %p229 = pnand %p227, %p228
      %p230 = pneg %p229
      // Predicated region
      $region33: #{counseling_ai_forward.7} parent=5 // pred_check
        _
      $region34: #{counseling_ai_forward.7} parent=5 // pred_check_branch
        %232 = sbr.rel (%p229) target = $region36
      $region35: #{counseling_ai_forward.7} parent=5 // pred_region
        %s233 = ssub.s32 %s16, 1
        %p234 = scmp.lt.s32.totalorder %s21, 1
        %s235 = scalar_select %p234, %s21, 1
        %s236 = smul.addr %s235, 8
        %s237 = scalar_lea.vmem %s0, %s236
        %p238 = pneg %p42
        %p239 = pneg %p39
        %p240 = pneg %p63
        %p241 = pneg %p60
        %p242 = pneg %p84
        %p243 = pneg %p81
        %p244 = scmp.lt.s32.totalorder %s21, 1
        %s245 = scalar_select %p244, %s21, 1
        %s246 = smul.addr %s245, 8
        %s247 = scalar_lea.vmem %s3, %s246
        %p248 = pneg %p110
        %p249 = pneg %p107
        %p250 = pneg %p136
        %p251 = pneg %p133
        %s252 = sand.u32 %s123, 1
        %s253 = scalar_lea.sflag [#allocation3], %s252
        %s254 = sand.u32 %s123, 1
        %s255 = smul.addr %s254, 8
        %s256 = scalar_lea.vmem [#allocation2], %s255
        %p257 = pneg %p162
        %p258 = pneg %p159
        %p259 = scmp.lt.s32.totalorder %s21, 1
        %s260 = scalar_select %p259, %s21, 1
        %s261 = scalar_lea.vmem %s5, %s260
        %p262 = pneg %p188
        %p263 = pneg %p185
        %p264 = scmp.lt.s32.totalorder %s21, 1
        %s265 = scalar_select %p264, %s21, 1
        %s266 = scalar_lea.vmem %s6, %s265
        %p267 = scmp.lt.s32.totalorder %s21, 1
        %s268 = scalar_select %p267, %s21, 1
        %s269 = smul.addr %s268, 8
        %s270 = scalar_lea.vmem %s0, %s269
        %p271 = scmp.lt.s32.totalorder %s21, 1
        %s272 = scalar_select %p271, %s21, 1
        %s273 = smul.addr %s272, 8
        %s274 = scalar_lea.vmem %s3, %s273
        %p275 = scmp.lt.s32.totalorder %s21, 1
        %s276 = scalar_select %p275, %s21, 1
        %s277 = scalar_lea.vmem %s5, %s276
        %p278 = scmp.lt.s32.totalorder %s21, 1
        %s279 = scalar_select %p278, %s21, 1
        %s280 = scalar_lea.vmem %s6, %s279
        %v282 = vld [vmem:[%s270] sm:$0xff]
        %v283 = vpack.c.bf16 %v282, %v282
        %v284 = vld [vmem:[%s1] sm:$0xf]
        %v285 = vld [vmem:[%s1 + $0x4] sm:$0xf]
        %v286 = vld [vmem:[%s1 + $0x8] sm:$0xf]
        %v287 = vld [vmem:[%s1 + $0xc] sm:$0xf]
        %v288 = vld [vmem:[%s2] sm:$0x1]
        %v290 = vlaneseq
        %v291 = vshrl.u32 %v290, 7
        %v292 = vsub.s32 0, %v291
        %v293 = vrot.slane %v288, %v292
        %v299 = vunpack.c.l.b16 %v284
        %v300 = vunpack.c.l.b16 %v285
        %v301 = vunpack.c.l.b16 %v286
        %v302 = vunpack.c.l.b16 %v287
        %v303 = vpack.c.b16 %v300, %v299
        %v304 = vpack.c.b16 %v302, %v301
        %vm307 = vcmask 261120
        %v309 = vsel %vm307, %v283, 0
        %311 = vmatprep.subr.bf16.mxu0 0
        %312 = vmatpush1.bf16.msra.mxu0 0
        %313 = vmatprep.subr.bf16.mxu0 0
        %314 = vmatpush1.bf16.msra.mxu0 0
        %315 = vmatprep.subr.bf16.mxu0 0
        %316 = vmatpush1.bf16.msra.mxu0 0
        %317 = vmatprep.subr.bf16.mxu0 0
        %318 = vmatpush1.bf16.msra.mxu0 0
        %319 = vmatprep.subr.bf16.mxu0 0
        %320 = vmatpush1.bf16.msra.mxu0 0
        %321 = vmatprep.subr.bf16.mxu0 0
        %322 = vmatpush1.bf16.msra.mxu0 0
        %323 = vmatprep.subr.bf16.mxu0 0
        %324 = vmatpush1.bf16.msra.mxu0 %v304
        %325 = vmatprep.subr.bf16.mxu0 0
        %326 = vmatpush1.bf16.msra.mxu0 %v303
        %327 = vmatprep.subr.bf16.mxu0 0
        %328 = vmatpush2.bf16.msra.mxu0 0
        %329 = vmatprep.subr.bf16.mxu0 0
        %330 = vmatpush2.bf16.msra.mxu0 0
        %331 = vmatprep.subr.bf16.mxu0 0
        %332 = vmatpush2.bf16.msra.mxu0 0
        %333 = vmatprep.subr.bf16.mxu0 0
        %334 = vmatpush2.bf16.msra.mxu0 0
        %335 = vmatprep.subr.bf16.mxu0 0
        %336 = vmatpush2.bf16.msra.mxu0 0
        %337 = vmatprep.subr.bf16.mxu0 0
        %338 = vmatpush2.bf16.msra.mxu0 0
        %339 = vmatprep.subr.bf16.mxu0 0
        %340 = vmatpush2.bf16.msra.mxu0 0
        %341 = vmatprep.subr.bf16.mxu0 0
        %342 = vmatpush2.bf16.msra.mxu0 0
        %343 = vmatprep.mubr.bf16.mxu0 0
        %344 = vmatmul.mubr.bf16.gmra.mxu0 %v309
        %v345 = vpop.f32.mrf.mxu0
        %v346 = vadd.f32 %v293, %v345
        %v347 = vpop.f32.mrf.mxu0
        %v348 = vpop.f32.mrf.mxu0
        %v349 = vpop.f32.mrf.mxu0
        %350 = vdwg.mxu0
        %vm351 = vcmask 523264
        %352 = vst.msk [vmem:[%s256] sm:$0xff] %vm351, %v346
        %v353 = vld [vmem:[%s274] sm:$0xff]
        %v354 = vsel %vm351, %v346, -inf
        %355 = vmax.xlane.f32.xlu0 %v354
        %v356 = vpop.xlane.xlu0 %355
        %v357 = vsub.f32 %v346, %v356
        %v358 = vmul.f32 %v357, 1.442695
        %v359 = vpow.pop %v358
        %v360 = vsel %vm351, %v359, 0.0
        %361 = vadd.xlane.f32.xlu0 %v360
        %v362 = vpop.xlane.xlu0 %361
        %v363 = vlog2.pop %v362
        %v364 = vmul.f32 %v363, 0.6931472
        %v365 = vadd.f32 %v364, %v356
        %v366 = vlaneseq
        %v367 = vand.u32 %v366, 127
        %368 = vset.pattern.permute.xlu0 0
        %369 = vperm.xlu0 %368, %v353
        %v370 = vpop.permute.xlu0 %369
        %vm371 = vcmp.eq.s32.totalorder %v367, %v370
        %v372 = vsel %vm371, %v346, 0.0
        %v373 = vsel %vm351, %v372, 0.0
        %374 = vadd.xlane.f32.xlu0 %v373
        %v375 = vpop.xlane.xlu0 %374
        %vm376 = vcmp.ne.s32.totalorder %v353, 4294967196
        %v377 = vsel %vm376, 1, 0
        %v378 = vcvt.s32.f32 %v377
        %v379 = vsub.f32 %v365, %v375
        %v380 = vmul.f32 %v379, %v378
        %vm381 = vcmask 7168
        %v382 = vsel %vm381, %v380, 0.0
        %v383 = vrot.slane %v382, 4
        %v384 = vadd.f32 %v382, %v383
        %v385 = vrot.slane %v384, 2
        %v386 = vadd.f32 %v384, %v385
        %v387 = vrot.slane %v386, 1
        %v388 = vadd.f32 %v386, %v387
        %vm389 = vcmask 0
        %390 = vst.msk [vmem:[%s277] sm:$0x1] %vm389, %v388
        %v391 = vsel %vm381, %v378, 0.0
        %v392 = vrot.slane %v391, 4
        %v393 = vadd.f32 %v391, %v392
        %v394 = vrot.slane %v393, 2
        %v395 = vadd.f32 %v393, %v394
        %v396 = vrot.slane %v395, 1
        %v397 = vadd.f32 %v395, %v396
        %398 = vst.msk [vmem:[%s280] sm:$0x1] %vm389, %v397
        %s399 = sand.u32 %s123, 1
        %s400 = scalar_lea.sflag [#allocation3], %s399
        %s401 = sand.u32 %s123, 1
        %s402 = smul.addr %s401, 8
        %s403 = scalar_lea.vmem [#allocation2], %s402
        %p404 = scmp.lt.s32.totalorder %s21, 1
        %s405 = scalar_select %p404, %s21, 1
        %s406 = scalar_lea.vmem %s5, %s405
        %p407 = scmp.lt.s32.totalorder %s21, 1
        %s408 = scalar_select %p407, %s21, 1
        %s409 = scalar_lea.vmem %s6, %s408
        // Predicated region
        $region37: #{counseling_ai_forward.7} parent=35 // pred_check
          %p410 = pneg %p133
        $region38: #{counseling_ai_forward.7} parent=35 // pred_check_branch
          %412 = sbr.rel (%p410) target = $region40
        $region39: #{counseling_ai_forward.7} parent=35 // pred_region
          %s414 = ssub.s32 128, 128
          %415 = vsyncadd %s400, %s414
          %s416 = smul.addr %s21, 128
          %s417 = scalar_lea.hbm %s4, %s416
          %s419 = sshll.u32 %s403, 4
          %s420 = int_to_ptr.vmem [resolvable:$true] %s419
          %422 = dma.vmem_to_hbm [thread:$0]  %s420, 128, %s417, %s400
        $region40: #{counseling_ai_forward.7} parent=35 // pred_fallthru
          _
        // Predicated region
        $region41: #{counseling_ai_forward.7} parent=35 // pred_check
          %p423 = pneg %p159
        $region42: #{counseling_ai_forward.7} parent=35 // pred_check_branch
          %425 = sbr.rel (%p423) target = $region44
        $region43: #{counseling_ai_forward.7} parent=35 // pred_region
          _
        $region44: #{counseling_ai_forward.7} parent=35 // pred_fallthru
          _
        // Predicated region
        $region45: #{counseling_ai_forward.7} parent=35 // pred_check
          %p426 = pneg %p185
        $region46: #{counseling_ai_forward.7} parent=35 // pred_check_branch
          %428 = sbr.rel (%p426) target = $region48
        $region47: #{counseling_ai_forward.7} parent=35 // pred_region
          _
        $region48: #{counseling_ai_forward.7} parent=35 // pred_fallthru
          _
      $region36: #{counseling_ai_forward.7} parent=5 // pred_fallthru
        _
      %p429 = scmp.le.s32.totalorder 2, %s16
      // Predicated region
      $region49: #{counseling_ai_forward.7} parent=5 // pred_check
        %p430 = pneg %p429
      $region50: #{counseling_ai_forward.7} parent=5 // pred_check_branch
        %432 = sbr.rel (%p430) target = $region52
      $region51: #{counseling_ai_forward.7} parent=5 // pred_region
        %s433 = ssub.s32 %s16, 2
        // Predicated region
        $region53: #{counseling_ai_forward.7} parent=51 // pred_check
          %p434 = pneg %p139
        $region54: #{counseling_ai_forward.7} parent=51 // pred_check_branch
          %436 = sbr.rel (%p434) target = $region56
        $region55: #{counseling_ai_forward.7} parent=51 // pred_region
          %s437 = sand.u32 %s124, 1
          %s438 = scalar_lea.sflag [#allocation3], %s437
          %s439 = sand.u32 %s124, 1
          %s440 = smul.addr %s439, 8
          %s441 = scalar_lea.vmem [#allocation2], %s440
          %442 = dma.done %s438, 128
        $region56: #{counseling_ai_forward.7} parent=51 // pred_fallthru
          _
        // Predicated region
        $region57: #{counseling_ai_forward.7} parent=51 // pred_check
          %p443 = pneg %p165
        $region58: #{counseling_ai_forward.7} parent=51 // pred_check_branch
          %445 = sbr.rel (%p443) target = $region60
        $region59: #{counseling_ai_forward.7} parent=51 // pred_region
          %p446 = scmp.lt.s32.totalorder %s22, 1
          %s447 = scalar_select %p446, %s22, 1
          %s448 = scalar_lea.vmem %s5, %s447
        $region60: #{counseling_ai_forward.7} parent=51 // pred_fallthru
          _
        // Predicated region
        $region61: #{counseling_ai_forward.7} parent=51 // pred_check
          %p449 = pneg %p191
        $region62: #{counseling_ai_forward.7} parent=51 // pred_check_branch
          %451 = sbr.rel (%p449) target = $region64
        $region63: #{counseling_ai_forward.7} parent=51 // pred_region
          %p452 = scmp.lt.s32.totalorder %s22, 1
          %s453 = scalar_select %p452, %s22, 1
          %s454 = scalar_lea.vmem %s6, %s453
        $region64: #{counseling_ai_forward.7} parent=51 // pred_fallthru
          _
      $region52: #{counseling_ai_forward.7} parent=5 // pred_fallthru
        _
    $region6: #{counseling_ai_forward.7} parent=1 // loop_footer
      %s20 = sadd.s32 1, %s16
    $region7: #{counseling_ai_forward.7} parent=1 // loop_footer_branch
      %15 = sbr.rel target = $region3
    $region8: #{counseling_ai_forward.7} parent=1 // loop_exit
      _
    %455 = vsyncpa [#allocation3], 1
    %s456 = scalar_lea.sflag [#allocation3], 1
    %457 = vsyncpa %s456, 1

</llo_original>
